<compile_context>
chip_gen: v5e
topology: v5e:2x2
jax: 0.10.0
libtpu: 0.0.40
codegen_flags: <defaults>
</compile_context>

<pallas_src>
import functools
import math

import jax
import jax.numpy as jnp
from jax.experimental import pallas as pl
from jax.experimental.pallas import tpu as pltpu

LN_EPS = 1e-5  # PyTorch nn.LayerNorm default


# ----------------------------------------------------------------------------
# Pallas kernel: full transformer encoder
# ----------------------------------------------------------------------------
def _layernorm_f32(y, w, b):
    mean = jnp.mean(y, axis=-1, keepdims=True)
    var = jnp.mean((y - mean) ** 2, axis=-1, keepdims=True)
    return (y - mean) * jax.lax.rsqrt(var + LN_EPS) * w + b


def _fused_encoder_kernel(x_ref, kbias_ref, wbig_ref, w2_ref, vec_ref,
                          o_ref, act_ref,
                          *, batch, seq_pad, nhead, d_hid, layers_per_step):
    """One grid step == `layers_per_step` post-norm TransformerEncoderLayers (eval mode).

    The activation stays resident in `act_ref` (VMEM scratch) across the whole grid;
    `o_ref` is written once, on the last step.
    """
    BS, E = act_ref.shape
    Dh = E // nhead
    scale = 1.0 / math.sqrt(Dh)
    step = pl.program_id(0)

    @pl.when(step == 0)
    def _():
        act_ref[...] = x_ref[...]          # x + positional encoding (added in the wrapper)

    x = act_ref[...]                       # (B*S_pad, E) f32, VMEM resident
    kbias = kbias_ref[...]                 # (1, S_pad) f32, -inf on padded key positions

    for j in range(layers_per_step):       # static loop (1 layer per step for big models)
        wbig = wbig_ref[j]                 # (E, 3E + E + H) bf16: [wqkv | wo | w1]
        w2 = w2_ref[j]                     # (H, E) bf16
        vec = vec_ref[j]                   # (8, vec_w) f32: packed row-vector params

        wqkv = wbig[:, :3 * E]
        wo = wbig[:, 3 * E:4 * E]
        w1 = wbig[:, 4 * E:4 * E + d_hid]

        bqkv = vec[0:1, :3 * E]
        bo = vec[1:2, :E]
        ln1w = vec[2:3, :E]
        ln1b = vec[3:4, :E]
        b1 = vec[4:5, :d_hid]
        b2 = vec[5:6, :E]
        ln2w = vec[6:7, :E]
        ln2b = vec[7:8, :E]

        # ---- self attention: one QKV matmul over the whole slab (bf16 in / f32 acc) ----
        qkv = jnp.dot(x.astype(jnp.bfloat16), wqkv,
                      preferred_element_type=jnp.float32) + bqkv          # (B*S_pad, 3E)

        attn = jnp.zeros((BS, E), jnp.float32)
        for h in range(nhead):             # static head loop; batch handled by the einsum
            q = qkv[:, h * Dh:(h + 1) * Dh].reshape(batch, seq_pad, Dh).astype(jnp.bfloat16)
            k = qkv[:, E + h * Dh:E + (h + 1) * Dh].reshape(batch, seq_pad, Dh).astype(jnp.bfloat16)
            v = qkv[:, 2 * E + h * Dh:2 * E + (h + 1) * Dh].reshape(batch, seq_pad, Dh).astype(jnp.bfloat16)
            s = jnp.einsum("bqd,bkd->bqk", q, k,
                           preferred_element_type=jnp.float32)            # (B, S_pad, S_pad)
            s = s * scale + kbias          # mask padded keys (f32 add; broadcast over b, q)
            s = s - jnp.max(s, axis=-1, keepdims=True)
            p = jnp.exp(s)
            # approx reciprocal runs on the EUP slot; ~1e-3 normalisation error (inference OK)
            p = p * pl.reciprocal(jnp.sum(p, axis=-1, keepdims=True), approx=True)
            ctx = jnp.einsum("bqk,bkd->bqd", p.astype(jnp.bfloat16), v,
                             preferred_element_type=jnp.float32)          # (B, S_pad, Dh)
            # per-head partial out-projection (no head concatenation)
            attn = attn + jnp.dot(ctx.reshape(BS, Dh).astype(jnp.bfloat16),
                                  wo[h * Dh:(h + 1) * Dh, :],
                                  preferred_element_type=jnp.float32)
        attn = attn + bo

        # ---- add & norm 1 (f32) ----
        y = _layernorm_f32(x + attn, ln1w, ln1b)

        # ---- feed forward over the whole slab ----
        h1 = jnp.maximum(
            jnp.dot(y.astype(jnp.bfloat16), w1, preferred_element_type=jnp.float32) + b1, 0.0)
        h2 = jnp.dot(h1.astype(jnp.bfloat16), w2, preferred_element_type=jnp.float32) + b2

        # ---- add & norm 2 ----
        x = _layernorm_f32(y + h2, ln2w, ln2b)

    act_ref[...] = x                       # single full-slab store per step

    @pl.when(step == pl.num_programs(0) - 1)
    def _():
        o_ref[...] = x


# ----------------------------------------------------------------------------
# Pallas wrapper
# ----------------------------------------------------------------------------
def fused_encoder(x_slab, kbias, layers, *, nhead, batch, seq_pad):
    BS, E = x_slab.shape
    assert BS == batch * seq_pad
    L, _, W = layers["wbig"].shape
    H = layers["w2"].shape[1]
    vec_w = layers["vec"].shape[-1]

    # Collapse the layer grid into one step if all stacked weights comfortably fit VMEM;
    # otherwise run one layer per grid step (weights auto-prefetched behind compute).
    per_layer_bytes = 2 * (E * W + H * E) + 4 * 8 * vec_w
    layers_per_step = L if L * per_layer_bytes <= (4 << 20) else 1
    n_steps = L // layers_per_step

    kern = functools.partial(_fused_encoder_kernel, batch=batch, seq_pad=seq_pad,
                             nhead=nhead, d_hid=H, layers_per_step=layers_per_step)

    def stacked(d0, d1):
        return pl.BlockSpec((layers_per_step, d0, d1), lambda g: (g, 0, 0))

    def resident(shape2d):
        # Same block every grid step -> fetched once / resident across the grid.
        return pl.BlockSpec(shape2d, lambda g: (0, 0))

    in_specs = [
        resident((BS, E)),            # x (+ pe), f32
        resident((1, seq_pad)),       # key-padding mask bias row, f32
        stacked(E, W),                # [wqkv | wo | w1] bf16
        stacked(H, E),                # w2 bf16
        stacked(8, vec_w),            # packed row-vector params, f32
    ]
    return pl.pallas_call(
        kern,
        out_shape=jax.ShapeDtypeStruct((BS, E), jnp.float32),
        grid_spec=pltpu.PrefetchScalarGridSpec(
            num_scalar_prefetch=0,
            grid=(n_steps,),
            in_specs=in_specs,
            out_specs=resident((BS, E)),
            scratch_shapes=[pltpu.VMEM((BS, E), jnp.float32)],   # resident activation
        ),
        compiler_params=pltpu.CompilerParams(
            dimension_semantics=("arbitrary",)),                 # layer axis is sequential
    )(x_slab, kbias, layers["wbig"], layers["w2"], layers["vec"])


# ----------------------------------------------------------------------------
# Glue: PE table, parameters, layout / padding
# ----------------------------------------------------------------------------
def positional_encoding_batchfirst(S, B, E):
    """PositionalEncoding1D as applied to a (S, B, E) tensor, returned batch-first (B, S, E):
    positions are indexed by the batch element (dim 1 of the original layout)."""
    channels = int(math.ceil(E / 2) * 2)
    inv_freq = 1.0 / (10000.0 ** (jnp.arange(0, channels, 2, dtype=jnp.float32) / channels))
    pos = jnp.arange(B, dtype=jnp.float32)
    sin_inp = pos[:, None] * inv_freq[None, :]                       # (B, channels/2)
    emb = jnp.stack([jnp.sin(sin_inp), jnp.cos(sin_inp)], axis=-1)   # interleave sin/cos
    emb = emb.reshape(B, channels)[:, :E]                            # (B, E)
    return jnp.broadcast_to(emb[:, None, :], (B, S, E))              # (B, S, E)


def init_params(key, d_model, nhead, d_hid, nlayers):
    keys = jax.random.split(key, 1 + nlayers)
    cls_token = jax.random.normal(keys[0], (1, 1, d_model), jnp.float32)
    vec_w = ((max(3 * d_model, d_hid, d_model) + 127) // 128) * 128
    s = 0.05
    wbigs, w2s, vecs = [], [], []
    for l in range(nlayers):
        k = jax.random.split(keys[1 + l], 8)
        # matmul weights pre-transposed (kernel computes x @ W)
        wqkv = (jax.random.normal(k[0], (d_model, 3 * d_model)) * s).astype(jnp.float32)
        bqkv = (jax.random.normal(k[1], (3 * d_model,)) * s).astype(jnp.float32)
        wo = (jax.random.normal(k[2], (d_model, d_model)) * s).astype(jnp.float32)
        bo = (jax.random.normal(k[3], (d_model,)) * s).astype(jnp.float32)
        w1 = (jax.random.normal(k[4], (d_model, d_hid)) * s).astype(jnp.float32)
        b1 = (jax.random.normal(k[5], (d_hid,)) * s).astype(jnp.float32)
        w2 = (jax.random.normal(k[6], (d_hid, d_model)) * s).astype(jnp.float32)
        b2 = (jax.random.normal(k[7], (d_model,)) * s).astype(jnp.float32)
        ln1w = jnp.ones((d_model,), jnp.float32); ln1b = jnp.zeros((d_model,), jnp.float32)
        ln2w = jnp.ones((d_model,), jnp.float32); ln2b = jnp.zeros((d_model,), jnp.float32)

        # one E-row bf16 weight slab per layer: [wqkv | wo | w1]
        wbigs.append(jnp.concatenate([wqkv, wo, w1], axis=1).astype(jnp.bfloat16))
        w2s.append(w2.astype(jnp.bfloat16))

        # all row-vector params packed into one (8, vec_w) f32 tile
        vec = jnp.zeros((8, vec_w), jnp.float32)
        vec = vec.at[0, :3 * d_model].set(bqkv)
        vec = vec.at[1, :d_model].set(bo)
        vec = vec.at[2, :d_model].set(ln1w)
        vec = vec.at[3, :d_model].set(ln1b)
        vec = vec.at[4, :d_hid].set(b1)
        vec = vec.at[5, :d_model].set(b2)
        vec = vec.at[6, :d_model].set(ln2w)
        vec = vec.at[7, :d_model].set(ln2b)
        vecs.append(vec)

    layers = {"wbig": jnp.stack(wbigs, axis=0),
              "w2": jnp.stack(w2s, axis=0),
              "vec": jnp.stack(vecs, axis=0)}
    return {"cls_token": cls_token, "layers": layers}


def transformer_model_forward(src, params, nhead):
    """src: (seq_len, batch, d_model) -> output: (seq_len + 1, batch, d_model)."""
    S0, B, E = src.shape
    # cls_token: repeat '() n e -> n b e' -> (1, B, E), concat along seq dim.
    cls = jnp.broadcast_to(params["cls_token"], (1, B, E))
    x = jnp.concatenate([cls, src], axis=0)                 # (S, B, E)
    S = S0 + 1
    S_pad = ((S + 7) // 8) * 8                              # sublane-tile aligned seq length

    # batch-first + positional encoding add (fused into the wrapper) + pad + flatten
    x_b = jnp.transpose(x, (1, 0, 2)) + positional_encoding_batchfirst(S, B, E)  # (B, S, E)
    x_b = jnp.pad(x_b, ((0, 0), (0, S_pad - S), (0, 0)))
    x_slab = x_b.reshape(B * S_pad, E).astype(jnp.float32)

    # additive attention bias row masking the padded key positions (broadcast in-kernel)
    kbias = jnp.where(jnp.arange(S_pad)[None, :] < S, 0.0, -1e30).astype(jnp.float32)  # (1,S_pad)

    out_slab = fused_encoder(x_slab, kbias, params["layers"],
                             nhead=nhead, batch=B, seq_pad=S_pad)
    out = out_slab.reshape(B, S_pad, E)[:, :S]              # drop padding rows
    return jnp.transpose(out, (1, 0, 2))                    # back to (S, B, E)


# ----------------------------------------------------------------------------
if __name__ == "__main__":
    SEQ, BATCH, D_MODEL, NHEAD, D_HID, NLAYERS = 8, 2, 32, 4, 64, 2

    key = jax.random.PRNGKey(0)
    kp, kx = jax.random.split(key)
    params = init_params(kp, D_MODEL, NHEAD, D_HID, NLAYERS)
    src = jax.random.normal(kx, (SEQ, BATCH, D_MODEL), jnp.float32)

    out = transformer_model_forward(src, params, NHEAD)
    out = jax.block_until_ready(out)

    assert out.shape == (SEQ + 1, BATCH, D_MODEL), out.shape
    assert bool(jnp.all(jnp.isfinite(out)))
    print("KERNEL_OK")
</pallas_src>

<mosaic_0001>
module attributes {stable_mosaic.version = 11 : i64} {
  func.func @_fused_encoder_kernel(%arg0: i32, %arg1: memref<32x32xf32, #tpu.memory_space<vmem>>, %arg2: memref<1x16xf32, #tpu.memory_space<vmem>>, %arg3: memref<2x32x192xbf16, #tpu.memory_space<vmem>>, %arg4: memref<2x64x32xbf16, #tpu.memory_space<vmem>>, %arg5: memref<2x8x128xf32, #tpu.memory_space<vmem>>, %arg6: memref<32x32xf32, #tpu.memory_space<vmem>>, %arg7: memref<32x32xf32, #tpu.memory_space<vmem>>) attributes {dimension_semantics = [#tpu.dimension_semantics<arbitrary>], iteration_bounds = array<i64: 1>, scalar_prefetch = 0 : i64, scratch_operands = 1 : i64, tpu.core_type = #tpu.core_type<tc>, window_params = [{pipeline_mode = #tpu.pipeline_mode<synchronous>, transform_indices = @transform_0, window_bounds = array<i64: 32, 32>}, {pipeline_mode = #tpu.pipeline_mode<synchronous>, transform_indices = @transform_1, window_bounds = array<i64: 1, 16>}, {transform_indices = @transform_2, window_bounds = array<i64: 2, 32, 192>}, {transform_indices = @transform_3, window_bounds = array<i64: 2, 64, 32>}, {transform_indices = @transform_4, window_bounds = array<i64: 2, 8, 128>}, {pipeline_mode = #tpu.pipeline_mode<synchronous>, transform_indices = @transform_5, window_bounds = array<i64: 32, 32>}]} {
    %c0_i32 = arith.constant 0 : i32
    %0 = arith.cmpi eq, %arg0, %c0_i32 : i32
    %1 = arith.extui %0 : i1 to i32
    %c0_i32_0 = arith.constant 0 : i32
    %2 = arith.cmpi ne, %1, %c0_i32_0 : i32
    scf.if %2 {
      %c0_102 = arith.constant 0 : index
      %c0_103 = arith.constant 0 : index
      %425 = vector.load %arg1[%c0_102, %c0_103] : memref<32x32xf32, #tpu.memory_space<vmem>>, vector<32x32xf32>
      %c0_104 = arith.constant 0 : index
      %c0_105 = arith.constant 0 : index
      %426 = vector.load %arg7[%c0_104, %c0_105] : memref<32x32xf32, #tpu.memory_space<vmem>>, vector<32x32xf32>
      tpu.vector_store %arg7[%c0_104, %c0_105], %425 {strides = array<i32>} : memref<32x32xf32, #tpu.memory_space<vmem>>, vector<32x32xf32>,
    } else {
    }
    %c0 = arith.constant 0 : index
    %c0_1 = arith.constant 0 : index
    %3 = vector.load %arg7[%c0, %c0_1] : memref<32x32xf32, #tpu.memory_space<vmem>>, vector<32x32xf32>
    %c0_2 = arith.constant 0 : index
    %c0_3 = arith.constant 0 : index
    %4 = vector.load %arg2[%c0_2, %c0_3] : memref<1x16xf32, #tpu.memory_space<vmem>>, vector<1x16xf32>
    %c0_4 = arith.constant 0 : index
    %c0_5 = arith.constant 0 : index
    %c0_6 = arith.constant 0 : index
    %5 = vector.load %arg3[%c0_4, %c0_5, %c0_6] : memref<2x32x192xbf16, #tpu.memory_space<vmem>>, vector<1x32x192xbf16>
    %6 = vector.shape_cast %5 : vector<1x32x192xbf16> to vector<32x192xbf16>
    %c0_7 = arith.constant 0 : index
    %c0_8 = arith.constant 0 : index
    %c0_9 = arith.constant 0 : index
    %7 = vector.load %arg4[%c0_7, %c0_8, %c0_9] : memref<2x64x32xbf16, #tpu.memory_space<vmem>>, vector<1x64x32xbf16>
    %8 = vector.shape_cast %7 : vector<1x64x32xbf16> to vector<64x32xbf16>
    %c0_10 = arith.constant 0 : index
    %c0_11 = arith.constant 0 : index
    %c0_12 = arith.constant 0 : index
    %9 = vector.load %arg5[%c0_10, %c0_11, %c0_12] : memref<2x8x128xf32, #tpu.memory_space<vmem>>, vector<1x8x128xf32>
    %10 = vector.shape_cast %9 : vector<1x8x128xf32> to vector<8x128xf32>
    %11 = vector.extract_strided_slice %6 {offsets = [0, 0], sizes = [32, 96], strides = [1, 1]} : vector<32x192xbf16> to vector<32x96xbf16>
    %12 = vector.extract_strided_slice %6 {offsets = [0, 96], sizes = [32, 32], strides = [1, 1]} : vector<32x192xbf16> to vector<32x32xbf16>
    %13 = vector.extract_strided_slice %6 {offsets = [0, 128], sizes = [32, 64], strides = [1, 1]} : vector<32x192xbf16> to vector<32x64xbf16>
    %14 = vector.extract_strided_slice %10 {offsets = [0, 0], sizes = [1, 96], strides = [1, 1]} : vector<8x128xf32> to vector<1x96xf32>
    %15 = vector.extract_strided_slice %10 {offsets = [1, 0], sizes = [1, 32], strides = [1, 1]} : vector<8x128xf32> to vector<1x32xf32>
    %16 = vector.extract_strided_slice %10 {offsets = [2, 0], sizes = [1, 32], strides = [1, 1]} : vector<8x128xf32> to vector<1x32xf32>
    %17 = vector.extract_strided_slice %10 {offsets = [3, 0], sizes = [1, 32], strides = [1, 1]} : vector<8x128xf32> to vector<1x32xf32>
    %18 = vector.extract_strided_slice %10 {offsets = [4, 0], sizes = [1, 64], strides = [1, 1]} : vector<8x128xf32> to vector<1x64xf32>
    %19 = vector.extract_strided_slice %10 {offsets = [5, 0], sizes = [1, 32], strides = [1, 1]} : vector<8x128xf32> to vector<1x32xf32>
    %20 = vector.extract_strided_slice %10 {offsets = [6, 0], sizes = [1, 32], strides = [1, 1]} : vector<8x128xf32> to vector<1x32xf32>
    %21 = vector.extract_strided_slice %10 {offsets = [7, 0], sizes = [1, 32], strides = [1, 1]} : vector<8x128xf32> to vector<1x32xf32>
    %22 = arith.truncf %3 : vector<32x32xf32> to vector<32x32xbf16>
    %cst = arith.constant dense<0.000000e+00> : vector<32x96xf32>
    %23 = tpu.matmul %22, %11, %cst {dimension_numbers = #tpu.dot_dimension_numbers<[1], [0], [0], [1], [0, 0, 1, 1], [], []>} : vector<32x32xbf16>, vector<32x96xbf16>, vector<32x96xf32> -> vector<32x96xf32>
    %24 = vector.broadcast %14 : vector<1x96xf32> to vector<32x96xf32>
    %25 = arith.addf %23, %24 : vector<32x96xf32>
    %cst_13 = arith.constant 0.000000e+00 : f32
    %26 = vector.broadcast %cst_13 : f32 to vector<32x32xf32>
    %27 = vector.extract_strided_slice %25 {offsets = [0, 0], sizes = [32, 8], strides = [1, 1]} : vector<32x96xf32> to vector<32x8xf32>
    %28 = vector.shape_cast %27 : vector<32x8xf32> to vector<2x16x8xf32>
    %29 = arith.truncf %28 : vector<2x16x8xf32> to vector<2x16x8xbf16>
    %30 = vector.extract_strided_slice %25 {offsets = [0, 32], sizes = [32, 8], strides = [1, 1]} : vector<32x96xf32> to vector<32x8xf32>
    %31 = vector.shape_cast %30 : vector<32x8xf32> to vector<2x16x8xf32>
    %32 = arith.truncf %31 : vector<2x16x8xf32> to vector<2x16x8xbf16>
    %33 = vector.extract_strided_slice %25 {offsets = [0, 64], sizes = [32, 8], strides = [1, 1]} : vector<32x96xf32> to vector<32x8xf32>
    %34 = vector.shape_cast %33 : vector<32x8xf32> to vector<2x16x8xf32>
    %35 = arith.truncf %34 : vector<2x16x8xf32> to vector<2x16x8xbf16>
    "tpu.trace_start"() <{level = 10 : i32, message = "bqd,bkd->bqk"}> : () -> ()
    %cst_14 = arith.constant dense<0.000000e+00> : vector<2x16x16xf32>
    %36 = tpu.matmul %29, %32, %cst_14 {dimension_numbers = #tpu.dot_dimension_numbers<[2], [2], [1], [1], [0, 0, 0, 1, 1, 1], [0], [0]>} : vector<2x16x8xbf16>, vector<2x16x8xbf16>, vector<2x16x16xf32> -> vector<2x16x16xf32>
    "tpu.trace_stop"() : () -> ()
    %cst_15 = arith.constant 0.353553385 : f32
    %37 = vector.broadcast %cst_15 : f32 to vector<2x16x16xf32>
    %38 = arith.mulf %36, %37 : vector<2x16x16xf32>
    %39 = vector.shape_cast %4 : vector<1x16xf32> to vector<1x1x16xf32>
    %40 = vector.broadcast %39 : vector<1x1x16xf32> to vector<2x16x16xf32>
    %41 = arith.addf %38, %40 : vector<2x16x16xf32>
    %cst_16 = arith.constant dense<0xFF800000> : vector<2x16xf32>
    %42 = vector.multi_reduction <maximumf>, %41, %cst_16 [2] : vector<2x16x16xf32> to vector<2x16xf32>
    %43 = vector.shape_cast %42 : vector<2x16xf32> to vector<2x16x1xf32>
    %44 = vector.broadcast %43 : vector<2x16x1xf32> to vector<2x16x16xf32>
    %45 = arith.subf %41, %44 : vector<2x16x16xf32>
    %46 = math.exp %45 : vector<2x16x16xf32>
    %cst_17 = arith.constant dense<0.000000e+00> : vector<2x16xf32>
    %47 = vector.multi_reduction <add>, %46, %cst_17 [2] : vector<2x16x16xf32> to vector<2x16xf32>
    %48 = vector.shape_cast %47 : vector<2x16xf32> to vector<2x16x1xf32>
    %49 = tpu.reciprocal %48 {approx = true} : vector<2x16x1xf32> -> vector<2x16x1xf32>
    %50 = vector.broadcast %49 : vector<2x16x1xf32> to vector<2x16x16xf32>
    %51 = arith.mulf %46, %50 : vector<2x16x16xf32>
    %52 = arith.truncf %51 : vector<2x16x16xf32> to vector<2x16x16xbf16>
    "tpu.trace_start"() <{level = 10 : i32, message = "bqk,bkd->bqd"}> : () -> ()
    %cst_18 = arith.constant dense<0.000000e+00> : vector<2x16x8xf32>
    %53 = tpu.matmul %52, %35, %cst_18 {dimension_numbers = #tpu.dot_dimension_numbers<[2], [1], [1], [2], [0, 0, 0, 1, 1, 2], [0], [0]>} : vector<2x16x16xbf16>, vector<2x16x8xbf16>, vector<2x16x8xf32> -> vector<2x16x8xf32>
    "tpu.trace_stop"() : () -> ()
    %54 = vector.shape_cast %53 : vector<2x16x8xf32> to vector<32x8xf32>
    %55 = arith.truncf %54 : vector<32x8xf32> to vector<32x8xbf16>
    %56 = vector.extract_strided_slice %12 {offsets = [0, 0], sizes = [8, 32], strides = [1, 1]} : vector<32x32xbf16> to vector<8x32xbf16>
    %cst_19 = arith.constant dense<0.000000e+00> : vector<32x32xf32>
    %57 = tpu.matmul %55, %56, %cst_19 {dimension_numbers = #tpu.dot_dimension_numbers<[1], [0], [0], [1], [0, 0, 1, 1], [], []>} : vector<32x8xbf16>, vector<8x32xbf16>, vector<32x32xf32> -> vector<32x32xf32>
    %58 = arith.addf %26, %57 : vector<32x32xf32>
    %59 = vector.extract_strided_slice %25 {offsets = [0, 8], sizes = [32, 8], strides = [1, 1]} : vector<32x96xf32> to vector<32x8xf32>
    %60 = vector.shape_cast %59 : vector<32x8xf32> to vector<2x16x8xf32>
    %61 = arith.truncf %60 : vector<2x16x8xf32> to vector<2x16x8xbf16>
    %62 = vector.extract_strided_slice %25 {offsets = [0, 40], sizes = [32, 8], strides = [1, 1]} : vector<32x96xf32> to vector<32x8xf32>
    %63 = vector.shape_cast %62 : vector<32x8xf32> to vector<2x16x8xf32>
    %64 = arith.truncf %63 : vector<2x16x8xf32> to vector<2x16x8xbf16>
    %65 = vector.extract_strided_slice %25 {offsets = [0, 72], sizes = [32, 8], strides = [1, 1]} : vector<32x96xf32> to vector<32x8xf32>
    %66 = vector.shape_cast %65 : vector<32x8xf32> to vector<2x16x8xf32>
    %67 = arith.truncf %66 : vector<2x16x8xf32> to vector<2x16x8xbf16>
    "tpu.trace_start"() <{level = 10 : i32, message = "bqd,bkd->bqk"}> : () -> ()
    %cst_20 = arith.constant dense<0.000000e+00> : vector<2x16x16xf32>
    %68 = tpu.matmul %61, %64, %cst_20 {dimension_numbers = #tpu.dot_dimension_numbers<[2], [2], [1], [1], [0, 0, 0, 1, 1, 1], [0], [0]>} : vector<2x16x8xbf16>, vector<2x16x8xbf16>, vector<2x16x16xf32> -> vector<2x16x16xf32>
    "tpu.trace_stop"() : () -> ()
    %cst_21 = arith.constant 0.353553385 : f32
    %69 = vector.broadcast %cst_21 : f32 to vector<2x16x16xf32>
    %70 = arith.mulf %68, %69 : vector<2x16x16xf32>
    %71 = vector.shape_cast %4 : vector<1x16xf32> to vector<1x1x16xf32>
    %72 = vector.broadcast %71 : vector<1x1x16xf32> to vector<2x16x16xf32>
    %73 = arith.addf %70, %72 : vector<2x16x16xf32>
    %cst_22 = arith.constant dense<0xFF800000> : vector<2x16xf32>
    %74 = vector.multi_reduction <maximumf>, %73, %cst_22 [2] : vector<2x16x16xf32> to vector<2x16xf32>
    %75 = vector.shape_cast %74 : vector<2x16xf32> to vector<2x16x1xf32>
    %76 = vector.broadcast %75 : vector<2x16x1xf32> to vector<2x16x16xf32>
    %77 = arith.subf %73, %76 : vector<2x16x16xf32>
    %78 = math.exp %77 : vector<2x16x16xf32>
    %cst_23 = arith.constant dense<0.000000e+00> : vector<2x16xf32>
    %79 = vector.multi_reduction <add>, %78, %cst_23 [2] : vector<2x16x16xf32> to vector<2x16xf32>
    %80 = vector.shape_cast %79 : vector<2x16xf32> to vector<2x16x1xf32>
    %81 = tpu.reciprocal %80 {approx = true} : vector<2x16x1xf32> -> vector<2x16x1xf32>
    %82 = vector.broadcast %81 : vector<2x16x1xf32> to vector<2x16x16xf32>
    %83 = arith.mulf %78, %82 : vector<2x16x16xf32>
    %84 = arith.truncf %83 : vector<2x16x16xf32> to vector<2x16x16xbf16>
    "tpu.trace_start"() <{level = 10 : i32, message = "bqk,bkd->bqd"}> : () -> ()
    %cst_24 = arith.constant dense<0.000000e+00> : vector<2x16x8xf32>
    %85 = tpu.matmul %84, %67, %cst_24 {dimension_numbers = #tpu.dot_dimension_numbers<[2], [1], [1], [2], [0, 0, 0, 1, 1, 2], [0], [0]>} : vector<2x16x16xbf16>, vector<2x16x8xbf16>, vector<2x16x8xf32> -> vector<2x16x8xf32>
    "tpu.trace_stop"() : () -> ()
    %86 = vector.shape_cast %85 : vector<2x16x8xf32> to vector<32x8xf32>
    %87 = arith.truncf %86 : vector<32x8xf32> to vector<32x8xbf16>
    %88 = vector.extract_strided_slice %12 {offsets = [8, 0], sizes = [8, 32], strides = [1, 1]} : vector<32x32xbf16> to vector<8x32xbf16>
    %cst_25 = arith.constant dense<0.000000e+00> : vector<32x32xf32>
    %89 = tpu.matmul %87, %88, %cst_25 {dimension_numbers = #tpu.dot_dimension_numbers<[1], [0], [0], [1], [0, 0, 1, 1], [], []>} : vector<32x8xbf16>, vector<8x32xbf16>, vector<32x32xf32> -> vector<32x32xf32>
    %90 = arith.addf %58, %89 : vector<32x32xf32>
    %91 = vector.extract_strided_slice %25 {offsets = [0, 16], sizes = [32, 8], strides = [1, 1]} : vector<32x96xf32> to vector<32x8xf32>
    %92 = vector.shape_cast %91 : vector<32x8xf32> to vector<2x16x8xf32>
    %93 = arith.truncf %92 : vector<2x16x8xf32> to vector<2x16x8xbf16>
    %94 = vector.extract_strided_slice %25 {offsets = [0, 48], sizes = [32, 8], strides = [1, 1]} : vector<32x96xf32> to vector<32x8xf32>
    %95 = vector.shape_cast %94 : vector<32x8xf32> to vector<2x16x8xf32>
    %96 = arith.truncf %95 : vector<2x16x8xf32> to vector<2x16x8xbf16>
    %97 = vector.extract_strided_slice %25 {offsets = [0, 80], sizes = [32, 8], strides = [1, 1]} : vector<32x96xf32> to vector<32x8xf32>
    %98 = vector.shape_cast %97 : vector<32x8xf32> to vector<2x16x8xf32>
    %99 = arith.truncf %98 : vector<2x16x8xf32> to vector<2x16x8xbf16>
    "tpu.trace_start"() <{level = 10 : i32, message = "bqd,bkd->bqk"}> : () -> ()
    %cst_26 = arith.constant dense<0.000000e+00> : vector<2x16x16xf32>
    %100 = tpu.matmul %93, %96, %cst_26 {dimension_numbers = #tpu.dot_dimension_numbers<[2], [2], [1], [1], [0, 0, 0, 1, 1, 1], [0], [0]>} : vector<2x16x8xbf16>, vector<2x16x8xbf16>, vector<2x16x16xf32> -> vector<2x16x16xf32>
    "tpu.trace_stop"() : () -> ()
    %cst_27 = arith.constant 0.353553385 : f32
    %101 = vector.broadcast %cst_27 : f32 to vector<2x16x16xf32>
    %102 = arith.mulf %100, %101 : vector<2x16x16xf32>
    %103 = vector.shape_cast %4 : vector<1x16xf32> to vector<1x1x16xf32>
    %104 = vector.broadcast %103 : vector<1x1x16xf32> to vector<2x16x16xf32>
    %105 = arith.addf %102, %104 : vector<2x16x16xf32>
    %cst_28 = arith.constant dense<0xFF800000> : vector<2x16xf32>
    %106 = vector.multi_reduction <maximumf>, %105, %cst_28 [2] : vector<2x16x16xf32> to vector<2x16xf32>
    %107 = vector.shape_cast %106 : vector<2x16xf32> to vector<2x16x1xf32>
    %108 = vector.broadcast %107 : vector<2x16x1xf32> to vector<2x16x16xf32>
    %109 = arith.subf %105, %108 : vector<2x16x16xf32>
    %110 = math.exp %109 : vector<2x16x16xf32>
    %cst_29 = arith.constant dense<0.000000e+00> : vector<2x16xf32>
    %111 = vector.multi_reduction <add>, %110, %cst_29 [2] : vector<2x16x16xf32> to vector<2x16xf32>
    %112 = vector.shape_cast %111 : vector<2x16xf32> to vector<2x16x1xf32>
    %113 = tpu.reciprocal %112 {approx = true} : vector<2x16x1xf32> -> vector<2x16x1xf32>
    %114 = vector.broadcast %113 : vector<2x16x1xf32> to vector<2x16x16xf32>
    %115 = arith.mulf %110, %114 : vector<2x16x16xf32>
    %116 = arith.truncf %115 : vector<2x16x16xf32> to vector<2x16x16xbf16>
    "tpu.trace_start"() <{level = 10 : i32, message = "bqk,bkd->bqd"}> : () -> ()
    %cst_30 = arith.constant dense<0.000000e+00> : vector<2x16x8xf32>
    %117 = tpu.matmul %116, %99, %cst_30 {dimension_numbers = #tpu.dot_dimension_numbers<[2], [1], [1], [2], [0, 0, 0, 1, 1, 2], [0], [0]>} : vector<2x16x16xbf16>, vector<2x16x8xbf16>, vector<2x16x8xf32> -> vector<2x16x8xf32>
    "tpu.trace_stop"() : () -> ()
    %118 = vector.shape_cast %117 : vector<2x16x8xf32> to vector<32x8xf32>
    %119 = arith.truncf %118 : vector<32x8xf32> to vector<32x8xbf16>
    %120 = vector.extract_strided_slice %12 {offsets = [16, 0], sizes = [8, 32], strides = [1, 1]} : vector<32x32xbf16> to vector<8x32xbf16>
    %cst_31 = arith.constant dense<0.000000e+00> : vector<32x32xf32>
    %121 = tpu.matmul %119, %120, %cst_31 {dimension_numbers = #tpu.dot_dimension_numbers<[1], [0], [0], [1], [0, 0, 1, 1], [], []>} : vector<32x8xbf16>, vector<8x32xbf16>, vector<32x32xf32> -> vector<32x32xf32>
    %122 = arith.addf %90, %121 : vector<32x32xf32>
    %123 = vector.extract_strided_slice %25 {offsets = [0, 24], sizes = [32, 8], strides = [1, 1]} : vector<32x96xf32> to vector<32x8xf32>
    %124 = vector.shape_cast %123 : vector<32x8xf32> to vector<2x16x8xf32>
    %125 = arith.truncf %124 : vector<2x16x8xf32> to vector<2x16x8xbf16>
    %126 = vector.extract_strided_slice %25 {offsets = [0, 56], sizes = [32, 8], strides = [1, 1]} : vector<32x96xf32> to vector<32x8xf32>
    %127 = vector.shape_cast %126 : vector<32x8xf32> to vector<2x16x8xf32>
    %128 = arith.truncf %127 : vector<2x16x8xf32> to vector<2x16x8xbf16>
    %129 = vector.extract_strided_slice %25 {offsets = [0, 88], sizes = [32, 8], strides = [1, 1]} : vector<32x96xf32> to vector<32x8xf32>
    %130 = vector.shape_cast %129 : vector<32x8xf32> to vector<2x16x8xf32>
    %131 = arith.truncf %130 : vector<2x16x8xf32> to vector<2x16x8xbf16>
    "tpu.trace_start"() <{level = 10 : i32, message = "bqd,bkd->bqk"}> : () -> ()
    %cst_32 = arith.constant dense<0.000000e+00> : vector<2x16x16xf32>
    %132 = tpu.matmul %125, %128, %cst_32 {dimension_numbers = #tpu.dot_dimension_numbers<[2], [2], [1], [1], [0, 0, 0, 1, 1, 1], [0], [0]>} : vector<2x16x8xbf16>, vector<2x16x8xbf16>, vector<2x16x16xf32> -> vector<2x16x16xf32>
    "tpu.trace_stop"() : () -> ()
    %cst_33 = arith.constant 0.353553385 : f32
    %133 = vector.broadcast %cst_33 : f32 to vector<2x16x16xf32>
    %134 = arith.mulf %132, %133 : vector<2x16x16xf32>
    %135 = vector.shape_cast %4 : vector<1x16xf32> to vector<1x1x16xf32>
    %136 = vector.broadcast %135 : vector<1x1x16xf32> to vector<2x16x16xf32>
    %137 = arith.addf %134, %136 : vector<2x16x16xf32>
    %cst_34 = arith.constant dense<0xFF800000> : vector<2x16xf32>
    %138 = vector.multi_reduction <maximumf>, %137, %cst_34 [2] : vector<2x16x16xf32> to vector<2x16xf32>
    %139 = vector.shape_cast %138 : vector<2x16xf32> to vector<2x16x1xf32>
    %140 = vector.broadcast %139 : vector<2x16x1xf32> to vector<2x16x16xf32>
    %141 = arith.subf %137, %140 : vector<2x16x16xf32>
    %142 = math.exp %141 : vector<2x16x16xf32>
    %cst_35 = arith.constant dense<0.000000e+00> : vector<2x16xf32>
    %143 = vector.multi_reduction <add>, %142, %cst_35 [2] : vector<2x16x16xf32> to vector<2x16xf32>
    %144 = vector.shape_cast %143 : vector<2x16xf32> to vector<2x16x1xf32>
    %145 = tpu.reciprocal %144 {approx = true} : vector<2x16x1xf32> -> vector<2x16x1xf32>
    %146 = vector.broadcast %145 : vector<2x16x1xf32> to vector<2x16x16xf32>
    %147 = arith.mulf %142, %146 : vector<2x16x16xf32>
    %148 = arith.truncf %147 : vector<2x16x16xf32> to vector<2x16x16xbf16>
    "tpu.trace_start"() <{level = 10 : i32, message = "bqk,bkd->bqd"}> : () -> ()
    %cst_36 = arith.constant dense<0.000000e+00> : vector<2x16x8xf32>
    %149 = tpu.matmul %148, %131, %cst_36 {dimension_numbers = #tpu.dot_dimension_numbers<[2], [1], [1], [2], [0, 0, 0, 1, 1, 2], [0], [0]>} : vector<2x16x16xbf16>, vector<2x16x8xbf16>, vector<2x16x8xf32> -> vector<2x16x8xf32>
    "tpu.trace_stop"() : () -> ()
    %150 = vector.shape_cast %149 : vector<2x16x8xf32> to vector<32x8xf32>
    %151 = arith.truncf %150 : vector<32x8xf32> to vector<32x8xbf16>
    %152 = vector.extract_strided_slice %12 {offsets = [24, 0], sizes = [8, 32], strides = [1, 1]} : vector<32x32xbf16> to vector<8x32xbf16>
    %cst_37 = arith.constant dense<0.000000e+00> : vector<32x32xf32>
    %153 = tpu.matmul %151, %152, %cst_37 {dimension_numbers = #tpu.dot_dimension_numbers<[1], [0], [0], [1], [0, 0, 1, 1], [], []>} : vector<32x8xbf16>, vector<8x32xbf16>, vector<32x32xf32> -> vector<32x32xf32>
    %154 = arith.addf %122, %153 : vector<32x32xf32>
    %155 = vector.broadcast %15 : vector<1x32xf32> to vector<32x32xf32>
    %156 = arith.addf %154, %155 : vector<32x32xf32>
    %157 = arith.addf %3, %156 : vector<32x32xf32>
    %cst_38 = arith.constant dense<0.000000e+00> : vector<32xf32>
    %158 = vector.multi_reduction <add>, %157, %cst_38 [1] : vector<32x32xf32> to vector<32xf32>
    %159 = vector.shape_cast %158 : vector<32xf32> to vector<32x1xf32>
    %cst_39 = arith.constant 3.200000e+01 : f32
    %160 = vector.broadcast %cst_39 : f32 to vector<32x1xf32>
    %161 = arith.divf %159, %160 : vector<32x1xf32>
    %162 = vector.broadcast %161 : vector<32x1xf32> to vector<32x32xf32>
    %163 = arith.subf %157, %162 : vector<32x32xf32>
    %164 = arith.mulf %163, %163 : vector<32x32xf32>
    %cst_40 = arith.constant dense<0.000000e+00> : vector<32xf32>
    %165 = vector.multi_reduction <add>, %164, %cst_40 [1] : vector<32x32xf32> to vector<32xf32>
    %166 = vector.shape_cast %165 : vector<32xf32> to vector<32x1xf32>
    %cst_41 = arith.constant 3.200000e+01 : f32
    %167 = vector.broadcast %cst_41 : f32 to vector<32x1xf32>
    %168 = arith.divf %166, %167 : vector<32x1xf32>
    %169 = vector.broadcast %161 : vector<32x1xf32> to vector<32x32xf32>
    %170 = arith.subf %157, %169 : vector<32x32xf32>
    %cst_42 = arith.constant 9.99999974E-6 : f32
    %171 = vector.broadcast %cst_42 : f32 to vector<32x1xf32>
    %172 = arith.addf %168, %171 : vector<32x1xf32>
    %173 = math.rsqrt %172 : vector<32x1xf32>
    %174 = vector.broadcast %173 : vector<32x1xf32> to vector<32x32xf32>
    %175 = arith.mulf %170, %174 : vector<32x32xf32>
    %176 = vector.broadcast %16 : vector<1x32xf32> to vector<32x32xf32>
    %177 = arith.mulf %175, %176 : vector<32x32xf32>
    %178 = vector.broadcast %17 : vector<1x32xf32> to vector<32x32xf32>
    %179 = arith.addf %177, %178 : vector<32x32xf32>
    %180 = arith.truncf %179 : vector<32x32xf32> to vector<32x32xbf16>
    %cst_43 = arith.constant dense<0.000000e+00> : vector<32x64xf32>
    %181 = tpu.matmul %180, %13, %cst_43 {dimension_numbers = #tpu.dot_dimension_numbers<[1], [0], [0], [1], [0, 0, 1, 1], [], []>} : vector<32x32xbf16>, vector<32x64xbf16>, vector<32x64xf32> -> vector<32x64xf32>
    %182 = vector.broadcast %18 : vector<1x64xf32> to vector<32x64xf32>
    %183 = arith.addf %181, %182 : vector<32x64xf32>
    %cst_44 = arith.constant 0.000000e+00 : f32
    %184 = vector.broadcast %cst_44 : f32 to vector<32x64xf32>
    %185 = arith.maximumf %183, %184 : vector<32x64xf32>
    %186 = arith.truncf %185 : vector<32x64xf32> to vector<32x64xbf16>
    %cst_45 = arith.constant dense<0.000000e+00> : vector<32x32xf32>
    %187 = tpu.matmul %186, %8, %cst_45 {dimension_numbers = #tpu.dot_dimension_numbers<[1], [0], [0], [1], [0, 0, 1, 1], [], []>} : vector<32x64xbf16>, vector<64x32xbf16>, vector<32x32xf32> -> vector<32x32xf32>
    %188 = vector.broadcast %19 : vector<1x32xf32> to vector<32x32xf32>
    %189 = arith.addf %187, %188 : vector<32x32xf32>
    %190 = arith.addf %179, %189 : vector<32x32xf32>
    %cst_46 = arith.constant dense<0.000000e+00> : vector<32xf32>
    %191 = vector.multi_reduction <add>, %190, %cst_46 [1] : vector<32x32xf32> to vector<32xf32>
    %192 = vector.shape_cast %191 : vector<32xf32> to vector<32x1xf32>
    %cst_47 = arith.constant 3.200000e+01 : f32
    %193 = vector.broadcast %cst_47 : f32 to vector<32x1xf32>
    %194 = arith.divf %192, %193 : vector<32x1xf32>
    %195 = vector.broadcast %194 : vector<32x1xf32> to vector<32x32xf32>
    %196 = arith.subf %190, %195 : vector<32x32xf32>
    %197 = arith.mulf %196, %196 : vector<32x32xf32>
    %cst_48 = arith.constant dense<0.000000e+00> : vector<32xf32>
    %198 = vector.multi_reduction <add>, %197, %cst_48 [1] : vector<32x32xf32> to vector<32xf32>
    %199 = vector.shape_cast %198 : vector<32xf32> to vector<32x1xf32>
    %cst_49 = arith.constant 3.200000e+01 : f32
    %200 = vector.broadcast %cst_49 : f32 to vector<32x1xf32>
    %201 = arith.divf %199, %200 : vector<32x1xf32>
    %202 = vector.broadcast %194 : vector<32x1xf32> to vector<32x32xf32>
    %203 = arith.subf %190, %202 : vector<32x32xf32>
    %cst_50 = arith.constant 9.99999974E-6 : f32
    %204 = vector.broadcast %cst_50 : f32 to vector<32x1xf32>
    %205 = arith.addf %201, %204 : vector<32x1xf32>
    %206 = math.rsqrt %205 : vector<32x1xf32>
    %207 = vector.broadcast %206 : vector<32x1xf32> to vector<32x32xf32>
    %208 = arith.mulf %203, %207 : vector<32x32xf32>
    %209 = vector.broadcast %20 : vector<1x32xf32> to vector<32x32xf32>
    %210 = arith.mulf %208, %209 : vector<32x32xf32>
    %211 = vector.broadcast %21 : vector<1x32xf32> to vector<32x32xf32>
    %212 = arith.addf %210, %211 : vector<32x32xf32>
    %c1 = arith.constant 1 : index
    %c0_51 = arith.constant 0 : index
    %c0_52 = arith.constant 0 : index
    %213 = vector.load %arg3[%c1, %c0_51, %c0_52] : memref<2x32x192xbf16, #tpu.memory_space<vmem>>, vector<1x32x192xbf16>
    %214 = vector.shape_cast %213 : vector<1x32x192xbf16> to vector<32x192xbf16>
    %c1_53 = arith.constant 1 : index
    %c0_54 = arith.constant 0 : index
    %c0_55 = arith.constant 0 : index
    %215 = vector.load %arg4[%c1_53, %c0_54, %c0_55] : memref<2x64x32xbf16, #tpu.memory_space<vmem>>, vector<1x64x32xbf16>
    %216 = vector.shape_cast %215 : vector<1x64x32xbf16> to vector<64x32xbf16>
    %c1_56 = arith.constant 1 : index
    %c0_57 = arith.constant 0 : index
    %c0_58 = arith.constant 0 : index
    %217 = vector.load %arg5[%c1_56, %c0_57, %c0_58] : memref<2x8x128xf32, #tpu.memory_space<vmem>>, vector<1x8x128xf32>
    %218 = vector.shape_cast %217 : vector<1x8x128xf32> to vector<8x128xf32>
    %219 = vector.extract_strided_slice %214 {offsets = [0, 0], sizes = [32, 96], strides = [1, 1]} : vector<32x192xbf16> to vector<32x96xbf16>
    %220 = vector.extract_strided_slice %214 {offsets = [0, 96], sizes = [32, 32], strides = [1, 1]} : vector<32x192xbf16> to vector<32x32xbf16>
    %221 = vector.extract_strided_slice %214 {offsets = [0, 128], sizes = [32, 64], strides = [1, 1]} : vector<32x192xbf16> to vector<32x64xbf16>
    %222 = vector.extract_strided_slice %218 {offsets = [0, 0], sizes = [1, 96], strides = [1, 1]} : vector<8x128xf32> to vector<1x96xf32>
    %223 = vector.extract_strided_slice %218 {offsets = [1, 0], sizes = [1, 32], strides = [1, 1]} : vector<8x128xf32> to vector<1x32xf32>
    %224 = vector.extract_strided_slice %218 {offsets = [2, 0], sizes = [1, 32], strides = [1, 1]} : vector<8x128xf32> to vector<1x32xf32>
    %225 = vector.extract_strided_slice %218 {offsets = [3, 0], sizes = [1, 32], strides = [1, 1]} : vector<8x128xf32> to vector<1x32xf32>
    %226 = vector.extract_strided_slice %218 {offsets = [4, 0], sizes = [1, 64], strides = [1, 1]} : vector<8x128xf32> to vector<1x64xf32>
    %227 = vector.extract_strided_slice %218 {offsets = [5, 0], sizes = [1, 32], strides = [1, 1]} : vector<8x128xf32> to vector<1x32xf32>
    %228 = vector.extract_strided_slice %218 {offsets = [6, 0], sizes = [1, 32], strides = [1, 1]} : vector<8x128xf32> to vector<1x32xf32>
    %229 = vector.extract_strided_slice %218 {offsets = [7, 0], sizes = [1, 32], strides = [1, 1]} : vector<8x128xf32> to vector<1x32xf32>
    %230 = arith.truncf %212 : vector<32x32xf32> to vector<32x32xbf16>
    %cst_59 = arith.constant dense<0.000000e+00> : vector<32x96xf32>
    %231 = tpu.matmul %230, %219, %cst_59 {dimension_numbers = #tpu.dot_dimension_numbers<[1], [0], [0], [1], [0, 0, 1, 1], [], []>} : vector<32x32xbf16>, vector<32x96xbf16>, vector<32x96xf32> -> vector<32x96xf32>
    %232 = vector.broadcast %222 : vector<1x96xf32> to vector<32x96xf32>
    %233 = arith.addf %231, %232 : vector<32x96xf32>
    %cst_60 = arith.constant 0.000000e+00 : f32
    %234 = vector.broadcast %cst_60 : f32 to vector<32x32xf32>
    %235 = vector.extract_strided_slice %233 {offsets = [0, 0], sizes = [32, 8], strides = [1, 1]} : vector<32x96xf32> to vector<32x8xf32>
    %236 = vector.shape_cast %235 : vector<32x8xf32> to vector<2x16x8xf32>
    %237 = arith.truncf %236 : vector<2x16x8xf32> to vector<2x16x8xbf16>
    %238 = vector.extract_strided_slice %233 {offsets = [0, 32], sizes = [32, 8], strides = [1, 1]} : vector<32x96xf32> to vector<32x8xf32>
    %239 = vector.shape_cast %238 : vector<32x8xf32> to vector<2x16x8xf32>
    %240 = arith.truncf %239 : vector<2x16x8xf32> to vector<2x16x8xbf16>
    %241 = vector.extract_strided_slice %233 {offsets = [0, 64], sizes = [32, 8], strides = [1, 1]} : vector<32x96xf32> to vector<32x8xf32>
    %242 = vector.shape_cast %241 : vector<32x8xf32> to vector<2x16x8xf32>
    %243 = arith.truncf %242 : vector<2x16x8xf32> to vector<2x16x8xbf16>
    "tpu.trace_start"() <{level = 10 : i32, message = "bqd,bkd->bqk"}> : () -> ()
    %cst_61 = arith.constant dense<0.000000e+00> : vector<2x16x16xf32>
    %244 = tpu.matmul %237, %240, %cst_61 {dimension_numbers = #tpu.dot_dimension_numbers<[2], [2], [1], [1], [0, 0, 0, 1, 1, 1], [0], [0]>} : vector<2x16x8xbf16>, vector<2x16x8xbf16>, vector<2x16x16xf32> -> vector<2x16x16xf32>
    "tpu.trace_stop"() : () -> ()
    %cst_62 = arith.constant 0.353553385 : f32
    %245 = vector.broadcast %cst_62 : f32 to vector<2x16x16xf32>
    %246 = arith.mulf %244, %245 : vector<2x16x16xf32>
    %247 = vector.shape_cast %4 : vector<1x16xf32> to vector<1x1x16xf32>
    %248 = vector.broadcast %247 : vector<1x1x16xf32> to vector<2x16x16xf32>
    %249 = arith.addf %246, %248 : vector<2x16x16xf32>
    %cst_63 = arith.constant dense<0xFF800000> : vector<2x16xf32>
    %250 = vector.multi_reduction <maximumf>, %249, %cst_63 [2] : vector<2x16x16xf32> to vector<2x16xf32>
    %251 = vector.shape_cast %250 : vector<2x16xf32> to vector<2x16x1xf32>
    %252 = vector.broadcast %251 : vector<2x16x1xf32> to vector<2x16x16xf32>
    %253 = arith.subf %249, %252 : vector<2x16x16xf32>
    %254 = math.exp %253 : vector<2x16x16xf32>
    %cst_64 = arith.constant dense<0.000000e+00> : vector<2x16xf32>
    %255 = vector.multi_reduction <add>, %254, %cst_64 [2] : vector<2x16x16xf32> to vector<2x16xf32>
    %256 = vector.shape_cast %255 : vector<2x16xf32> to vector<2x16x1xf32>
    %257 = tpu.reciprocal %256 {approx = true} : vector<2x16x1xf32> -> vector<2x16x1xf32>
    %258 = vector.broadcast %257 : vector<2x16x1xf32> to vector<2x16x16xf32>
    %259 = arith.mulf %254, %258 : vector<2x16x16xf32>
    %260 = arith.truncf %259 : vector<2x16x16xf32> to vector<2x16x16xbf16>
    "tpu.trace_start"() <{level = 10 : i32, message = "bqk,bkd->bqd"}> : () -> ()
    %cst_65 = arith.constant dense<0.000000e+00> : vector<2x16x8xf32>
    %261 = tpu.matmul %260, %243, %cst_65 {dimension_numbers = #tpu.dot_dimension_numbers<[2], [1], [1], [2], [0, 0, 0, 1, 1, 2], [0], [0]>} : vector<2x16x16xbf16>, vector<2x16x8xbf16>, vector<2x16x8xf32> -> vector<2x16x8xf32>
    "tpu.trace_stop"() : () -> ()
    %262 = vector.shape_cast %261 : vector<2x16x8xf32> to vector<32x8xf32>
    %263 = arith.truncf %262 : vector<32x8xf32> to vector<32x8xbf16>
    %264 = vector.extract_strided_slice %220 {offsets = [0, 0], sizes = [8, 32], strides = [1, 1]} : vector<32x32xbf16> to vector<8x32xbf16>
    %cst_66 = arith.constant dense<0.000000e+00> : vector<32x32xf32>
    %265 = tpu.matmul %263, %264, %cst_66 {dimension_numbers = #tpu.dot_dimension_numbers<[1], [0], [0], [1], [0, 0, 1, 1], [], []>} : vector<32x8xbf16>, vector<8x32xbf16>, vector<32x32xf32> -> vector<32x32xf32>
    %266 = arith.addf %234, %265 : vector<32x32xf32>
    %267 = vector.extract_strided_slice %233 {offsets = [0, 8], sizes = [32, 8], strides = [1, 1]} : vector<32x96xf32> to vector<32x8xf32>
    %268 = vector.shape_cast %267 : vector<32x8xf32> to vector<2x16x8xf32>
    %269 = arith.truncf %268 : vector<2x16x8xf32> to vector<2x16x8xbf16>
    %270 = vector.extract_strided_slice %233 {offsets = [0, 40], sizes = [32, 8], strides = [1, 1]} : vector<32x96xf32> to vector<32x8xf32>
    %271 = vector.shape_cast %270 : vector<32x8xf32> to vector<2x16x8xf32>
    %272 = arith.truncf %271 : vector<2x16x8xf32> to vector<2x16x8xbf16>
    %273 = vector.extract_strided_slice %233 {offsets = [0, 72], sizes = [32, 8], strides = [1, 1]} : vector<32x96xf32> to vector<32x8xf32>
    %274 = vector.shape_cast %273 : vector<32x8xf32> to vector<2x16x8xf32>
    %275 = arith.truncf %274 : vector<2x16x8xf32> to vector<2x16x8xbf16>
    "tpu.trace_start"() <{level = 10 : i32, message = "bqd,bkd->bqk"}> : () -> ()
    %cst_67 = arith.constant dense<0.000000e+00> : vector<2x16x16xf32>
    %276 = tpu.matmul %269, %272, %cst_67 {dimension_numbers = #tpu.dot_dimension_numbers<[2], [2], [1], [1], [0, 0, 0, 1, 1, 1], [0], [0]>} : vector<2x16x8xbf16>, vector<2x16x8xbf16>, vector<2x16x16xf32> -> vector<2x16x16xf32>
    "tpu.trace_stop"() : () -> ()
    %cst_68 = arith.constant 0.353553385 : f32
    %277 = vector.broadcast %cst_68 : f32 to vector<2x16x16xf32>
    %278 = arith.mulf %276, %277 : vector<2x16x16xf32>
    %279 = vector.shape_cast %4 : vector<1x16xf32> to vector<1x1x16xf32>
    %280 = vector.broadcast %279 : vector<1x1x16xf32> to vector<2x16x16xf32>
    %281 = arith.addf %278, %280 : vector<2x16x16xf32>
    %cst_69 = arith.constant dense<0xFF800000> : vector<2x16xf32>
    %282 = vector.multi_reduction <maximumf>, %281, %cst_69 [2] : vector<2x16x16xf32> to vector<2x16xf32>
    %283 = vector.shape_cast %282 : vector<2x16xf32> to vector<2x16x1xf32>
    %284 = vector.broadcast %283 : vector<2x16x1xf32> to vector<2x16x16xf32>
    %285 = arith.subf %281, %284 : vector<2x16x16xf32>
    %286 = math.exp %285 : vector<2x16x16xf32>
    %cst_70 = arith.constant dense<0.000000e+00> : vector<2x16xf32>
    %287 = vector.multi_reduction <add>, %286, %cst_70 [2] : vector<2x16x16xf32> to vector<2x16xf32>
    %288 = vector.shape_cast %287 : vector<2x16xf32> to vector<2x16x1xf32>
    %289 = tpu.reciprocal %288 {approx = true} : vector<2x16x1xf32> -> vector<2x16x1xf32>
    %290 = vector.broadcast %289 : vector<2x16x1xf32> to vector<2x16x16xf32>
    %291 = arith.mulf %286, %290 : vector<2x16x16xf32>
    %292 = arith.truncf %291 : vector<2x16x16xf32> to vector<2x16x16xbf16>
    "tpu.trace_start"() <{level = 10 : i32, message = "bqk,bkd->bqd"}> : () -> ()
    %cst_71 = arith.constant dense<0.000000e+00> : vector<2x16x8xf32>
    %293 = tpu.matmul %292, %275, %cst_71 {dimension_numbers = #tpu.dot_dimension_numbers<[2], [1], [1], [2], [0, 0, 0, 1, 1, 2], [0], [0]>} : vector<2x16x16xbf16>, vector<2x16x8xbf16>, vector<2x16x8xf32> -> vector<2x16x8xf32>
    "tpu.trace_stop"() : () -> ()
    %294 = vector.shape_cast %293 : vector<2x16x8xf32> to vector<32x8xf32>
    %295 = arith.truncf %294 : vector<32x8xf32> to vector<32x8xbf16>
    %296 = vector.extract_strided_slice %220 {offsets = [8, 0], sizes = [8, 32], strides = [1, 1]} : vector<32x32xbf16> to vector<8x32xbf16>
    %cst_72 = arith.constant dense<0.000000e+00> : vector<32x32xf32>
    %297 = tpu.matmul %295, %296, %cst_72 {dimension_numbers = #tpu.dot_dimension_numbers<[1], [0], [0], [1], [0, 0, 1, 1], [], []>} : vector<32x8xbf16>, vector<8x32xbf16>, vector<32x32xf32> -> vector<32x32xf32>
    %298 = arith.addf %266, %297 : vector<32x32xf32>
    %299 = vector.extract_strided_slice %233 {offsets = [0, 16], sizes = [32, 8], strides = [1, 1]} : vector<32x96xf32> to vector<32x8xf32>
    %300 = vector.shape_cast %299 : vector<32x8xf32> to vector<2x16x8xf32>
    %301 = arith.truncf %300 : vector<2x16x8xf32> to vector<2x16x8xbf16>
    %302 = vector.extract_strided_slice %233 {offsets = [0, 48], sizes = [32, 8], strides = [1, 1]} : vector<32x96xf32> to vector<32x8xf32>
    %303 = vector.shape_cast %302 : vector<32x8xf32> to vector<2x16x8xf32>
    %304 = arith.truncf %303 : vector<2x16x8xf32> to vector<2x16x8xbf16>
    %305 = vector.extract_strided_slice %233 {offsets = [0, 80], sizes = [32, 8], strides = [1, 1]} : vector<32x96xf32> to vector<32x8xf32>
    %306 = vector.shape_cast %305 : vector<32x8xf32> to vector<2x16x8xf32>
    %307 = arith.truncf %306 : vector<2x16x8xf32> to vector<2x16x8xbf16>
    "tpu.trace_start"() <{level = 10 : i32, message = "bqd,bkd->bqk"}> : () -> ()
    %cst_73 = arith.constant dense<0.000000e+00> : vector<2x16x16xf32>
    %308 = tpu.matmul %301, %304, %cst_73 {dimension_numbers = #tpu.dot_dimension_numbers<[2], [2], [1], [1], [0, 0, 0, 1, 1, 1], [0], [0]>} : vector<2x16x8xbf16>, vector<2x16x8xbf16>, vector<2x16x16xf32> -> vector<2x16x16xf32>
    "tpu.trace_stop"() : () -> ()
    %cst_74 = arith.constant 0.353553385 : f32
    %309 = vector.broadcast %cst_74 : f32 to vector<2x16x16xf32>
    %310 = arith.mulf %308, %309 : vector<2x16x16xf32>
    %311 = vector.shape_cast %4 : vector<1x16xf32> to vector<1x1x16xf32>
    %312 = vector.broadcast %311 : vector<1x1x16xf32> to vector<2x16x16xf32>
    %313 = arith.addf %310, %312 : vector<2x16x16xf32>
    %cst_75 = arith.constant dense<0xFF800000> : vector<2x16xf32>
    %314 = vector.multi_reduction <maximumf>, %313, %cst_75 [2] : vector<2x16x16xf32> to vector<2x16xf32>
    %315 = vector.shape_cast %314 : vector<2x16xf32> to vector<2x16x1xf32>
    %316 = vector.broadcast %315 : vector<2x16x1xf32> to vector<2x16x16xf32>
    %317 = arith.subf %313, %316 : vector<2x16x16xf32>
    %318 = math.exp %317 : vector<2x16x16xf32>
    %cst_76 = arith.constant dense<0.000000e+00> : vector<2x16xf32>
    %319 = vector.multi_reduction <add>, %318, %cst_76 [2] : vector<2x16x16xf32> to vector<2x16xf32>
    %320 = vector.shape_cast %319 : vector<2x16xf32> to vector<2x16x1xf32>
    %321 = tpu.reciprocal %320 {approx = true} : vector<2x16x1xf32> -> vector<2x16x1xf32>
    %322 = vector.broadcast %321 : vector<2x16x1xf32> to vector<2x16x16xf32>
    %323 = arith.mulf %318, %322 : vector<2x16x16xf32>
    %324 = arith.truncf %323 : vector<2x16x16xf32> to vector<2x16x16xbf16>
    "tpu.trace_start"() <{level = 10 : i32, message = "bqk,bkd->bqd"}> : () -> ()
    %cst_77 = arith.constant dense<0.000000e+00> : vector<2x16x8xf32>
    %325 = tpu.matmul %324, %307, %cst_77 {dimension_numbers = #tpu.dot_dimension_numbers<[2], [1], [1], [2], [0, 0, 0, 1, 1, 2], [0], [0]>} : vector<2x16x16xbf16>, vector<2x16x8xbf16>, vector<2x16x8xf32> -> vector<2x16x8xf32>
    "tpu.trace_stop"() : () -> ()
    %326 = vector.shape_cast %325 : vector<2x16x8xf32> to vector<32x8xf32>
    %327 = arith.truncf %326 : vector<32x8xf32> to vector<32x8xbf16>
    %328 = vector.extract_strided_slice %220 {offsets = [16, 0], sizes = [8, 32], strides = [1, 1]} : vector<32x32xbf16> to vector<8x32xbf16>
    %cst_78 = arith.constant dense<0.000000e+00> : vector<32x32xf32>
    %329 = tpu.matmul %327, %328, %cst_78 {dimension_numbers = #tpu.dot_dimension_numbers<[1], [0], [0], [1], [0, 0, 1, 1], [], []>} : vector<32x8xbf16>, vector<8x32xbf16>, vector<32x32xf32> -> vector<32x32xf32>
    %330 = arith.addf %298, %329 : vector<32x32xf32>
    %331 = vector.extract_strided_slice %233 {offsets = [0, 24], sizes = [32, 8], strides = [1, 1]} : vector<32x96xf32> to vector<32x8xf32>
    %332 = vector.shape_cast %331 : vector<32x8xf32> to vector<2x16x8xf32>
    %333 = arith.truncf %332 : vector<2x16x8xf32> to vector<2x16x8xbf16>
    %334 = vector.extract_strided_slice %233 {offsets = [0, 56], sizes = [32, 8], strides = [1, 1]} : vector<32x96xf32> to vector<32x8xf32>
    %335 = vector.shape_cast %334 : vector<32x8xf32> to vector<2x16x8xf32>
    %336 = arith.truncf %335 : vector<2x16x8xf32> to vector<2x16x8xbf16>
    %337 = vector.extract_strided_slice %233 {offsets = [0, 88], sizes = [32, 8], strides = [1, 1]} : vector<32x96xf32> to vector<32x8xf32>
    %338 = vector.shape_cast %337 : vector<32x8xf32> to vector<2x16x8xf32>
    %339 = arith.truncf %338 : vector<2x16x8xf32> to vector<2x16x8xbf16>
    "tpu.trace_start"() <{level = 10 : i32, message = "bqd,bkd->bqk"}> : () -> ()
    %cst_79 = arith.constant dense<0.000000e+00> : vector<2x16x16xf32>
    %340 = tpu.matmul %333, %336, %cst_79 {dimension_numbers = #tpu.dot_dimension_numbers<[2], [2], [1], [1], [0, 0, 0, 1, 1, 1], [0], [0]>} : vector<2x16x8xbf16>, vector<2x16x8xbf16>, vector<2x16x16xf32> -> vector<2x16x16xf32>
    "tpu.trace_stop"() : () -> ()
    %cst_80 = arith.constant 0.353553385 : f32
    %341 = vector.broadcast %cst_80 : f32 to vector<2x16x16xf32>
    %342 = arith.mulf %340, %341 : vector<2x16x16xf32>
    %343 = vector.shape_cast %4 : vector<1x16xf32> to vector<1x1x16xf32>
    %344 = vector.broadcast %343 : vector<1x1x16xf32> to vector<2x16x16xf32>
    %345 = arith.addf %342, %344 : vector<2x16x16xf32>
    %cst_81 = arith.constant dense<0xFF800000> : vector<2x16xf32>
    %346 = vector.multi_reduction <maximumf>, %345, %cst_81 [2] : vector<2x16x16xf32> to vector<2x16xf32>
    %347 = vector.shape_cast %346 : vector<2x16xf32> to vector<2x16x1xf32>
    %348 = vector.broadcast %347 : vector<2x16x1xf32> to vector<2x16x16xf32>
    %349 = arith.subf %345, %348 : vector<2x16x16xf32>
    %350 = math.exp %349 : vector<2x16x16xf32>
    %cst_82 = arith.constant dense<0.000000e+00> : vector<2x16xf32>
    %351 = vector.multi_reduction <add>, %350, %cst_82 [2] : vector<2x16x16xf32> to vector<2x16xf32>
    %352 = vector.shape_cast %351 : vector<2x16xf32> to vector<2x16x1xf32>
    %353 = tpu.reciprocal %352 {approx = true} : vector<2x16x1xf32> -> vector<2x16x1xf32>
    %354 = vector.broadcast %353 : vector<2x16x1xf32> to vector<2x16x16xf32>
    %355 = arith.mulf %350, %354 : vector<2x16x16xf32>
    %356 = arith.truncf %355 : vector<2x16x16xf32> to vector<2x16x16xbf16>
    "tpu.trace_start"() <{level = 10 : i32, message = "bqk,bkd->bqd"}> : () -> ()
    %cst_83 = arith.constant dense<0.000000e+00> : vector<2x16x8xf32>
    %357 = tpu.matmul %356, %339, %cst_83 {dimension_numbers = #tpu.dot_dimension_numbers<[2], [1], [1], [2], [0, 0, 0, 1, 1, 2], [0], [0]>} : vector<2x16x16xbf16>, vector<2x16x8xbf16>, vector<2x16x8xf32> -> vector<2x16x8xf32>
    "tpu.trace_stop"() : () -> ()
    %358 = vector.shape_cast %357 : vector<2x16x8xf32> to vector<32x8xf32>
    %359 = arith.truncf %358 : vector<32x8xf32> to vector<32x8xbf16>
    %360 = vector.extract_strided_slice %220 {offsets = [24, 0], sizes = [8, 32], strides = [1, 1]} : vector<32x32xbf16> to vector<8x32xbf16>
    %cst_84 = arith.constant dense<0.000000e+00> : vector<32x32xf32>
    %361 = tpu.matmul %359, %360, %cst_84 {dimension_numbers = #tpu.dot_dimension_numbers<[1], [0], [0], [1], [0, 0, 1, 1], [], []>} : vector<32x8xbf16>, vector<8x32xbf16>, vector<32x32xf32> -> vector<32x32xf32>
    %362 = arith.addf %330, %361 : vector<32x32xf32>
    %363 = vector.broadcast %223 : vector<1x32xf32> to vector<32x32xf32>
    %364 = arith.addf %362, %363 : vector<32x32xf32>
    %365 = arith.addf %212, %364 : vector<32x32xf32>
    %cst_85 = arith.constant dense<0.000000e+00> : vector<32xf32>
    %366 = vector.multi_reduction <add>, %365, %cst_85 [1] : vector<32x32xf32> to vector<32xf32>
    %367 = vector.shape_cast %366 : vector<32xf32> to vector<32x1xf32>
    %cst_86 = arith.constant 3.200000e+01 : f32
    %368 = vector.broadcast %cst_86 : f32 to vector<32x1xf32>
    %369 = arith.divf %367, %368 : vector<32x1xf32>
    %370 = vector.broadcast %369 : vector<32x1xf32> to vector<32x32xf32>
    %371 = arith.subf %365, %370 : vector<32x32xf32>
    %372 = arith.mulf %371, %371 : vector<32x32xf32>
    %cst_87 = arith.constant dense<0.000000e+00> : vector<32xf32>
    %373 = vector.multi_reduction <add>, %372, %cst_87 [1] : vector<32x32xf32> to vector<32xf32>
    %374 = vector.shape_cast %373 : vector<32xf32> to vector<32x1xf32>
    %cst_88 = arith.constant 3.200000e+01 : f32
    %375 = vector.broadcast %cst_88 : f32 to vector<32x1xf32>
    %376 = arith.divf %374, %375 : vector<32x1xf32>
    %377 = vector.broadcast %369 : vector<32x1xf32> to vector<32x32xf32>
    %378 = arith.subf %365, %377 : vector<32x32xf32>
    %cst_89 = arith.constant 9.99999974E-6 : f32
    %379 = vector.broadcast %cst_89 : f32 to vector<32x1xf32>
    %380 = arith.addf %376, %379 : vector<32x1xf32>
    %381 = math.rsqrt %380 : vector<32x1xf32>
    %382 = vector.broadcast %381 : vector<32x1xf32> to vector<32x32xf32>
    %383 = arith.mulf %378, %382 : vector<32x32xf32>
    %384 = vector.broadcast %224 : vector<1x32xf32> to vector<32x32xf32>
    %385 = arith.mulf %383, %384 : vector<32x32xf32>
    %386 = vector.broadcast %225 : vector<1x32xf32> to vector<32x32xf32>
    %387 = arith.addf %385, %386 : vector<32x32xf32>
    %388 = arith.truncf %387 : vector<32x32xf32> to vector<32x32xbf16>
    %cst_90 = arith.constant dense<0.000000e+00> : vector<32x64xf32>
    %389 = tpu.matmul %388, %221, %cst_90 {dimension_numbers = #tpu.dot_dimension_numbers<[1], [0], [0], [1], [0, 0, 1, 1], [], []>} : vector<32x32xbf16>, vector<32x64xbf16>, vector<32x64xf32> -> vector<32x64xf32>
    %390 = vector.broadcast %226 : vector<1x64xf32> to vector<32x64xf32>
    %391 = arith.addf %389, %390 : vector<32x64xf32>
    %cst_91 = arith.constant 0.000000e+00 : f32
    %392 = vector.broadcast %cst_91 : f32 to vector<32x64xf32>
    %393 = arith.maximumf %391, %392 : vector<32x64xf32>
    %394 = arith.truncf %393 : vector<32x64xf32> to vector<32x64xbf16>
    %cst_92 = arith.constant dense<0.000000e+00> : vector<32x32xf32>
    %395 = tpu.matmul %394, %216, %cst_92 {dimension_numbers = #tpu.dot_dimension_numbers<[1], [0], [0], [1], [0, 0, 1, 1], [], []>} : vector<32x64xbf16>, vector<64x32xbf16>, vector<32x32xf32> -> vector<32x32xf32>
    %396 = vector.broadcast %227 : vector<1x32xf32> to vector<32x32xf32>
    %397 = arith.addf %395, %396 : vector<32x32xf32>
    %398 = arith.addf %387, %397 : vector<32x32xf32>
    %cst_93 = arith.constant dense<0.000000e+00> : vector<32xf32>
    %399 = vector.multi_reduction <add>, %398, %cst_93 [1] : vector<32x32xf32> to vector<32xf32>
    %400 = vector.shape_cast %399 : vector<32xf32> to vector<32x1xf32>
    %cst_94 = arith.constant 3.200000e+01 : f32
    %401 = vector.broadcast %cst_94 : f32 to vector<32x1xf32>
    %402 = arith.divf %400, %401 : vector<32x1xf32>
    %403 = vector.broadcast %402 : vector<32x1xf32> to vector<32x32xf32>
    %404 = arith.subf %398, %403 : vector<32x32xf32>
    %405 = arith.mulf %404, %404 : vector<32x32xf32>
    %cst_95 = arith.constant dense<0.000000e+00> : vector<32xf32>
    %406 = vector.multi_reduction <add>, %405, %cst_95 [1] : vector<32x32xf32> to vector<32xf32>
    %407 = vector.shape_cast %406 : vector<32xf32> to vector<32x1xf32>
    %cst_96 = arith.constant 3.200000e+01 : f32
    %408 = vector.broadcast %cst_96 : f32 to vector<32x1xf32>
    %409 = arith.divf %407, %408 : vector<32x1xf32>
    %410 = vector.broadcast %402 : vector<32x1xf32> to vector<32x32xf32>
    %411 = arith.subf %398, %410 : vector<32x32xf32>
    %cst_97 = arith.constant 9.99999974E-6 : f32
    %412 = vector.broadcast %cst_97 : f32 to vector<32x1xf32>
    %413 = arith.addf %409, %412 : vector<32x1xf32>
    %414 = math.rsqrt %413 : vector<32x1xf32>
    %415 = vector.broadcast %414 : vector<32x1xf32> to vector<32x32xf32>
    %416 = arith.mulf %411, %415 : vector<32x32xf32>
    %417 = vector.broadcast %228 : vector<1x32xf32> to vector<32x32xf32>
    %418 = arith.mulf %416, %417 : vector<32x32xf32>
    %419 = vector.broadcast %229 : vector<1x32xf32> to vector<32x32xf32>
    %420 = arith.addf %418, %419 : vector<32x32xf32>
    %c0_98 = arith.constant 0 : index
    %c0_99 = arith.constant 0 : index
    %421 = vector.load %arg7[%c0_98, %c0_99] : memref<32x32xf32, #tpu.memory_space<vmem>>, vector<32x32xf32>
    tpu.vector_store %arg7[%c0_98, %c0_99], %420 {strides = array<i32>} : memref<32x32xf32, #tpu.memory_space<vmem>>, vector<32x32xf32>,
    %c0_i32_100 = arith.constant 0 : i32
    %422 = arith.cmpi eq, %arg0, %c0_i32_100 : i32
    %423 = arith.extui %422 : i1 to i32
    %c0_i32_101 = arith.constant 0 : i32
    %424 = arith.cmpi ne, %423, %c0_i32_101 : i32
    scf.if %424 {
      %c0_102 = arith.constant 0 : index
      %c0_103 = arith.constant 0 : index
      %425 = vector.load %arg6[%c0_102, %c0_103] : memref<32x32xf32, #tpu.memory_space<vmem>>, vector<32x32xf32>
      tpu.vector_store %arg6[%c0_102, %c0_103], %420 {strides = array<i32>} : memref<32x32xf32, #tpu.memory_space<vmem>>, vector<32x32xf32>,
    } else {
    }
    return
  }
  func.func @transform_0(%arg0: i32) -> (i32, i32) {
    %c0_i32 = arith.constant 0 : i32
    %c0_i32_0 = arith.constant 0 : i32
    %c0_i32_1 = arith.constant 0 : i32
    return %c0_i32, %c0_i32_0 : i32, i32
  }
  func.func @transform_1(%arg0: i32) -> (i32, i32) {
    %c0_i32 = arith.constant 0 : i32
    %c0_i32_0 = arith.constant 0 : i32
    %c0_i32_1 = arith.constant 0 : i32
    return %c0_i32, %c0_i32_0 : i32, i32
  }
  func.func @transform_2(%arg0: i32) -> (i32, i32, i32) {
    %c0_i32 = arith.constant 0 : i32
    %c0_i32_0 = arith.constant 0 : i32
    %c0_i32_1 = arith.constant 0 : i32
    return %arg0, %c0_i32, %c0_i32_0 : i32, i32, i32
  }
  func.func @transform_3(%arg0: i32) -> (i32, i32, i32) {
    %c0_i32 = arith.constant 0 : i32
    %c0_i32_0 = arith.constant 0 : i32
    %c0_i32_1 = arith.constant 0 : i32
    return %arg0, %c0_i32, %c0_i32_0 : i32, i32, i32
  }
  func.func @transform_4(%arg0: i32) -> (i32, i32, i32) {
    %c0_i32 = arith.constant 0 : i32
    %c0_i32_0 = arith.constant 0 : i32
    %c0_i32_1 = arith.constant 0 : i32
    return %arg0, %c0_i32, %c0_i32_0 : i32, i32, i32
  }
  func.func @transform_5(%arg0: i32) -> (i32, i32) {
    %c0_i32 = arith.constant 0 : i32
    %c0_i32_0 = arith.constant 0 : i32
    %c0_i32_1 = arith.constant 0 : i32
    return %c0_i32, %c0_i32_0 : i32, i32
  }
}

</mosaic_0001>

<llo_original>
// kernel: tpu_custom_call.1
$region0: #{tpu_custom_call.1}
  #allocation0 [shape = 'u32[]', space=smem, size = 0x4, offset = 0x4, fixed_abs, tag = 'smem constant byte address 0x4 - core index']
  #allocation1 [shape = 'u32[72,128]{1,0:T(1,128)}', space=vmem, size = 0x9000, scoped, tag = 'internal scratch']
  #allocation2 [shape = 'f32[32,32]{1,0:T(8,128)}', space=vmem, size = 0x4000, scoped, tag = 'scratch operand']
  %s0 = inlined_call_operand.vmem [shape: f32[32,32], index: 0, kind: input, shape index: {}]
  %s1 = inlined_call_operand.vmem [shape: f32[1,16], index: 1, kind: input, shape index: {}]
  %s2 = inlined_call_operand.vmem [shape: bf16[2,32,192], index: 2, kind: input, shape index: {}]
  %s3 = inlined_call_operand.vmem [shape: bf16[2,64,32], index: 3, kind: input, shape index: {}]
  %s4 = inlined_call_operand.hbm [shape: f32[2,8,128], index: 4, kind: input, shape index: {}]
  %s5 = inlined_call_operand.hbm [shape: f32[32,32], index: 5, kind: output, shape index: {}]
  %s6 = sld [smem:[#allocation0]]
  $region42: #{tpu_custom_call.1} parent=0
    _
  %s8 = ssub.s32 1, %s6
  %s9 = scalar_select 0, %s8, %s6
  $region1: #{tpu_custom_call.1} parent=0
    #allocation3 [shape = 'u8[8192]{0}', space=vmem, size = 0x2000, scoped, tag = 'input window, operand 4, single buffered']
    #allocation4 [shape = 's32[1]{0}', space=sflag, size = 0x4, scoped, tag = 'scoped memory for tpu_custom_call.1']
    #allocation5 [shape = 's32[1]{0}', space=sflag, size = 0x4, scoped, tag = 'scoped memory for tpu_custom_call.1']
    #allocation6 [shape = 'u8[16384]{0}', space=vmem, size = 0x4000, scoped, tag = 'output window, operand 0, single buffered']
    %10 = vsyncpa [#allocation4], 0
    %11 = vsyncpa [#allocation5], 0
    // Predicated region
    $region2: #{tpu_custom_call.1} parent=1 // pred_check
      _
    $region3: #{tpu_custom_call.1} parent=1 // pred_check_branch
      %13 = sbr.rel (0) target = $region5
    $region4: #{tpu_custom_call.1} parent=1 // pred_region
      _
    $region5: #{tpu_custom_call.1} parent=1 // pred_fallthru
      _
    // Predicated region
    $region6: #{tpu_custom_call.1} parent=1 // pred_check
      _
    $region7: #{tpu_custom_call.1} parent=1 // pred_check_branch
      %15 = sbr.rel (0) target = $region9
    $region8: #{tpu_custom_call.1} parent=1 // pred_region
      _
    $region9: #{tpu_custom_call.1} parent=1 // pred_fallthru
      _
    // Predicated region
    $region10: #{tpu_custom_call.1} parent=1 // pred_check
      _
    $region11: #{tpu_custom_call.1} parent=1 // pred_check_branch
      %17 = sbr.rel (0) target = $region13
    $region12: #{tpu_custom_call.1} parent=1 // pred_region
      _
    $region13: #{tpu_custom_call.1} parent=1 // pred_fallthru
      _
    // Predicated region
    $region14: #{tpu_custom_call.1} parent=1 // pred_check
      _
    $region15: #{tpu_custom_call.1} parent=1 // pred_check_branch
      %19 = sbr.rel (0) target = $region17
    $region16: #{tpu_custom_call.1} parent=1 // pred_region
      _
    $region17: #{tpu_custom_call.1} parent=1 // pred_fallthru
      _
    // Predicated region
    $region18: #{tpu_custom_call.1} parent=1 // pred_check
      _
    $region19: #{tpu_custom_call.1} parent=1 // pred_check_branch
      %21 = sbr.rel (0) target = $region21
    $region20: #{tpu_custom_call.1} parent=1 // pred_region
      %23 = vsyncadd [#allocation4], 0
      %s24 = sshll.u32 %s4, 4
      %s25 = int_to_ptr.hbm [resolvable:$true] %s24
      %s26 = sshll.u32 [#allocation3], 4
      %s27 = int_to_ptr.vmem [resolvable:$true] %s26
      %32 = dma.hbm_to_vmem [thread:$0]  %s25, 256, %s27, [#allocation4], 128, 128, 8
    $region21: #{tpu_custom_call.1} parent=1 // pred_fallthru
      _
    // Predicated region
    $region22: #{tpu_custom_call.1} parent=1 // pred_check
      _
    $region23: #{tpu_custom_call.1} parent=1 // pred_check_branch
      %34 = sbr.rel (0) target = $region25
    $region24: #{tpu_custom_call.1} parent=1 // pred_region
      %36 = dma.done [#allocation4], 256
    $region25: #{tpu_custom_call.1} parent=1 // pred_fallthru
      _
    %p38 = scmp.eq.s32.totalorder 0, 0
    // Predicated region
    $region26: #{tpu_custom_call.1} parent=1 // pred_check
      %p39 = pneg %p38
    $region27: #{tpu_custom_call.1} parent=1 // pred_check_branch
      %41 = sbr.rel (%p39) target = $region29
    $region28: #{tpu_custom_call.1} parent=1 // pred_region
      %v42 = vld [vmem:[%s0] sm:$0xff]
      %v43 = vld [vmem:[%s0 + $0x8] sm:$0xff]
      %v44 = vld [vmem:[%s0 + $0x10] sm:$0xff]
      %v45 = vld [vmem:[%s0 + $0x18] sm:$0xff]
      %vm46 = vcmask 261120
      %47 = vst.msk [vmem:[#allocation2] sm:$0xff] %vm46, %v42
      %48 = vst.msk [vmem:[#allocation2 + $0x8] sm:$0xff] %vm46, %v43
      %49 = vst.msk [vmem:[#allocation2 + $0x10] sm:$0xff] %vm46, %v44
      %50 = vst.msk [vmem:[#allocation2 + $0x18] sm:$0xff] %vm46, %v45
    $region29: #{tpu_custom_call.1} parent=1 // pred_fallthru
      _
    %v51 = vld [vmem:[#allocation2] sm:$0xff]
    %v52 = vld [vmem:[#allocation2 + $0x8] sm:$0xff]
    %v53 = vld [vmem:[#allocation2 + $0x10] sm:$0xff]
    %v54 = vld [vmem:[#allocation2 + $0x18] sm:$0xff]
    %v55 = vld [vmem:[%s1] sm:$0x1]
    %v56 = vld [vmem:[%s2] sm:$0xff]
    %v57 = vld [vmem:[%s2 + $0x8] sm:$0xff]
    %v58 = vld [vmem:[%s2 + $0x10] sm:$0xff]
    %v59 = vld [vmem:[%s2 + $0x18] sm:$0xff]
    %v60 = vld [vmem:[%s3] sm:$0xf]
    %v61 = vld [vmem:[%s3 + $0x4] sm:$0xf]
    %v62 = vld [vmem:[%s3 + $0x8] sm:$0xf]
    %v63 = vld [vmem:[%s3 + $0xc] sm:$0xf]
    %v64 = vld [vmem:[%s3 + $0x10] sm:$0xf]
    %v65 = vld [vmem:[%s3 + $0x14] sm:$0xf]
    %v66 = vld [vmem:[%s3 + $0x18] sm:$0xf]
    %v67 = vld [vmem:[%s3 + $0x1c] sm:$0xf]
    %v68 = vld [vmem:[#allocation3] sm:$0xff]
    %v69 = vpack.c.bf16 %v52, %v51
    %v70 = vpack.c.bf16 %v54, %v53
    %v71 = vperm.slane %v68, 0
    %v76 = vunpack.c.l.b16 %v56
    %v77 = vunpack.c.l.b16 %v57
    %v78 = vunpack.c.l.b16 %v58
    %v79 = vunpack.c.l.b16 %v59
    %v80 = vpack.c.b16 %v77, %v76
    %v81 = vpack.c.b16 %v79, %v78
    %vm84 = vcmask 261120
    %v86 = vsel %vm84, %v69, 0
    %v89 = vsel %vm84, %v70, 0
    %91 = vmatpush.bf16.msra.mxu0 0
    %92 = vmatpush.bf16.msra.mxu0 0
    %93 = vmatpush.bf16.msra.mxu0 0
    %94 = vmatpush.bf16.msra.mxu0 0
    %95 = vmatpush.bf16.msra.mxu0 0
    %96 = vmatpush.bf16.msra.mxu0 0
    %97 = vmatpush.bf16.msra.mxu0 %v81
    %98 = vmatpush.bf16.msra.mxu0 %v80
    %99 = vmatmul.bf16.gmra.mxu0 %v86
    %v100 = vpop.f32.mrf.mxu0
    %v101 = vadd.f32 %v71, %v100
    %v102 = vpop.f32.mrf.mxu0
    %v103 = vadd.f32 %v71, %v102
    %104 = vmatmul.bf16.gmra.mxu0 %v89
    %v105 = vpop.f32.mrf.mxu0
    %v106 = vadd.f32 %v71, %v105
    %v107 = vpop.f32.mrf.mxu0
    %v108 = vadd.f32 %v71, %v107
    %109 = vdwg.mxu0
    %v110 = vpack.c.bf16 %v101, %v101
    %v111 = vpack.c.bf16 %v103, %v103
    %v112 = vpack.c.bf16 %v106, %v106
    %v113 = vpack.c.bf16 %v108, %v108
    %v116 = vunpack.c.l.b16 %v110
    %v117 = vunpack.c.l.b16 %v111
    %v118 = vpack.c.b16 %v117, %v116
    %119 = vrot.lane.b32.xlu0 %v118, 96
    %v120 = vpop.permute.xlu0 %119
    %vm121 = vcmask 64512
    %v123 = vsel %vm121, %v118, 0
    %v126 = vsel %vm121, %v120, 0
    %128 = vmatpush.bf16.xpose.msra.mxu0 0
    %129 = vmatpush.bf16.xpose.msra.mxu0 0
    %130 = vmatpush.bf16.xpose.msra.mxu0 0
    %131 = vmatpush.bf16.xpose.msra.mxu0 0
    %132 = vmatpush.bf16.xpose.msra.mxu0 0
    %133 = vmatpush.bf16.xpose.msra.mxu0 0
    %134 = vmatpush.bf16.xpose.msra.mxu0 0
    %135 = vmatpush.bf16.xpose.msra.mxu0 %v126
    %136 = vmatmul.bf16.gmra.mxu0 %v123
    %v137 = vpop.f32.mrf.mxu0
    %v138 = vadd.f32 0.0, %v137
    %v139 = vpop.f32.mrf.mxu0
    %v140 = vadd.f32 0.0, %v139
    %141 = vdwg.mxu0
    %v144 = vunpack.c.l.b16 %v112
    %v145 = vunpack.c.l.b16 %v113
    %v146 = vpack.c.b16 %v145, %v144
    %147 = vrot.lane.b32.xlu0 %v146, 96
    %v148 = vpop.permute.xlu0 %147
    %v150 = vsel %vm121, %v146, 0
    %v153 = vsel %vm121, %v148, 0
    %155 = vmatpush.bf16.xpose.msra.mxu0 0
    %156 = vmatpush.bf16.xpose.msra.mxu0 0
    %157 = vmatpush.bf16.xpose.msra.mxu0 0
    %158 = vmatpush.bf16.xpose.msra.mxu0 0
    %159 = vmatpush.bf16.xpose.msra.mxu0 0
    %160 = vmatpush.bf16.xpose.msra.mxu0 0
    %161 = vmatpush.bf16.xpose.msra.mxu0 0
    %162 = vmatpush.bf16.xpose.msra.mxu0 %v153
    %163 = vmatmul.bf16.gmra.mxu0 %v150
    %v164 = vpop.f32.mrf.mxu0
    %v165 = vadd.f32 0.0, %v164
    %v166 = vpop.f32.mrf.mxu0
    %v167 = vadd.f32 0.0, %v166
    %168 = vdwg.mxu0
    %v169 = vmul.f32 %v138, 0.35355338
    %v170 = vmul.f32 %v140, 0.35355338
    %v171 = vmul.f32 %v165, 0.35355338
    %v172 = vmul.f32 %v167, 0.35355338
    %v174 = vperm.slane %v55, 0
    %v176 = vadd.f32 %v169, %v174
    %v177 = vadd.f32 %v170, %v174
    %v178 = vadd.f32 %v171, %v174
    %v179 = vadd.f32 %v172, %v174
    %vm180 = vcmask 130048
    %v181 = vsel %vm180, %v176, -inf
    %182 = vmax.xlane.f32.xlu0 %v181
    %v183 = vpop.xlane.xlu0 %182
    %v184 = vsel %vm180, %v177, -inf
    %185 = vmax.xlane.f32.xlu0 %v184
    %v186 = vpop.xlane.xlu0 %185
    %v187 = vsel %vm180, %v178, -inf
    %188 = vmax.xlane.f32.xlu0 %v187
    %v189 = vpop.xlane.xlu0 %188
    %v190 = vsel %vm180, %v179, -inf
    %191 = vmax.xlane.f32.xlu0 %v190
    %v192 = vpop.xlane.xlu0 %191
    %v193 = vsub.f32 %v176, %v183
    %v194 = vsub.f32 %v177, %v186
    %v195 = vsub.f32 %v178, %v189
    %v196 = vsub.f32 %v179, %v192
    %v197 = vmul.f32 %v193, 1.442695
    %v198 = vpow.pop %v197
    %v199 = vmul.f32 %v194, 1.442695
    %v200 = vpow.pop %v199
    %v201 = vmul.f32 %v195, 1.442695
    %v202 = vpow.pop %v201
    %v203 = vmul.f32 %v196, 1.442695
    %v204 = vpow.pop %v203
    %v205 = vsel %vm180, %v198, 0.0
    %206 = vadd.xlane.f32.xlu0 %v205
    %v207 = vpop.xlane.xlu0 %206
    %v208 = vsel %vm180, %v200, 0.0
    %209 = vadd.xlane.f32.xlu0 %v208
    %v210 = vpop.xlane.xlu0 %209
    %v211 = vsel %vm180, %v202, 0.0
    %212 = vadd.xlane.f32.xlu0 %v211
    %v213 = vpop.xlane.xlu0 %212
    %v214 = vsel %vm180, %v204, 0.0
    %215 = vadd.xlane.f32.xlu0 %v214
    %v216 = vpop.xlane.xlu0 %215
    %v217 = vrcp.pop %v207
    %v218 = vrcp.pop %v210
    %v219 = vrcp.pop %v213
    %v220 = vrcp.pop %v216
    %v221 = vmul.f32 %v198, %v217
    %v222 = vmul.f32 %v200, %v218
    %v223 = vmul.f32 %v202, %v219
    %v224 = vmul.f32 %v204, %v220
    %v225 = vpack.c.bf16 %v221, %v221
    %v226 = vpack.c.bf16 %v222, %v222
    %v227 = vpack.c.bf16 %v223, %v223
    %v228 = vpack.c.bf16 %v224, %v224
    %v231 = vunpack.c.l.b16 %v225
    %v232 = vunpack.c.l.b16 %v226
    %v233 = vpack.c.b16 %v232, %v231
    %234 = vrot.lane.b32.xlu0 %v118, 64
    %v235 = vpop.permute.xlu0 %234
    %v238 = vsel %vm180, %v233, 0
    %240 = vmatpush.bf16.msra.mxu0 0
    %241 = vmatpush.bf16.msra.mxu0 0
    %242 = vmatpush.bf16.msra.mxu0 0
    %243 = vmatpush.bf16.msra.mxu0 0
    %244 = vmatpush.bf16.msra.mxu0 0
    %245 = vmatpush.bf16.msra.mxu0 0
    %246 = vmatpush.bf16.msra.mxu0 0
    %247 = vmatpush.bf16.msra.mxu0 %v235
    %248 = vmatmul.bf16.gmra.mxu0 %v238
    %v249 = vpop.f32.mrf.mxu0
    %v250 = vadd.f32 0.0, %v249
    %v251 = vpop.f32.mrf.mxu0
    %v252 = vadd.f32 0.0, %v251
    %253 = vdwg.mxu0
    %v256 = vunpack.c.l.b16 %v227
    %v257 = vunpack.c.l.b16 %v228
    %v258 = vpack.c.b16 %v257, %v256
    %259 = vrot.lane.b32.xlu0 %v146, 64
    %v260 = vpop.permute.xlu0 %259
    %v263 = vsel %vm180, %v258, 0
    %265 = vmatpush.bf16.msra.mxu0 0
    %266 = vmatpush.bf16.msra.mxu0 0
    %267 = vmatpush.bf16.msra.mxu0 0
    %268 = vmatpush.bf16.msra.mxu0 0
    %269 = vmatpush.bf16.msra.mxu0 0
    %270 = vmatpush.bf16.msra.mxu0 0
    %271 = vmatpush.bf16.msra.mxu0 0
    %272 = vmatpush.bf16.msra.mxu0 %v260
    %273 = vmatmul.bf16.gmra.mxu0 %v263
    %v274 = vpop.f32.mrf.mxu0
    %v275 = vadd.f32 0.0, %v274
    %v276 = vpop.f32.mrf.mxu0
    %v277 = vadd.f32 0.0, %v276
    %278 = vdwg.mxu0
    %v279 = vpack.c.bf16 %v252, %v250
    %v280 = vpack.c.bf16 %v277, %v275
    %281 = vrot.lane.b32.xlu0 %v118, 120
    %v282 = vpop.permute.xlu0 %281
    %283 = vrot.lane.b32.xlu0 %v118, 88
    %v284 = vpop.permute.xlu0 %283
    %v286 = vsel %vm121, %v282, 0
    %v289 = vsel %vm121, %v284, 0
    %291 = vmatpush.bf16.xpose.msra.mxu0 0
    %292 = vmatpush.bf16.xpose.msra.mxu0 0
    %293 = vmatpush.bf16.xpose.msra.mxu0 0
    %294 = vmatpush.bf16.xpose.msra.mxu0 0
    %295 = vmatpush.bf16.xpose.msra.mxu0 0
    %296 = vmatpush.bf16.xpose.msra.mxu0 0
    %297 = vmatpush.bf16.xpose.msra.mxu0 0
    %298 = vmatpush.bf16.xpose.msra.mxu0 %v289
    %299 = vmatmul.bf16.gmra.mxu0 %v286
    %v300 = vpop.f32.mrf.mxu0
    %v301 = vadd.f32 0.0, %v300
    %v302 = vpop.f32.mrf.mxu0
    %v303 = vadd.f32 0.0, %v302
    %304 = vdwg.mxu0
    %305 = vrot.lane.b32.xlu0 %v146, 120
    %v306 = vpop.permute.xlu0 %305
    %307 = vrot.lane.b32.xlu0 %v146, 88
    %v308 = vpop.permute.xlu0 %307
    %v310 = vsel %vm121, %v306, 0
    %v313 = vsel %vm121, %v308, 0
    %315 = vmatpush.bf16.xpose.msra.mxu0 0
    %316 = vmatpush.bf16.xpose.msra.mxu0 0
    %317 = vmatpush.bf16.xpose.msra.mxu0 0
    %318 = vmatpush.bf16.xpose.msra.mxu0 0
    %319 = vmatpush.bf16.xpose.msra.mxu0 0
    %320 = vmatpush.bf16.xpose.msra.mxu0 0
    %321 = vmatpush.bf16.xpose.msra.mxu0 0
    %322 = vmatpush.bf16.xpose.msra.mxu0 %v313
    %323 = vmatmul.bf16.gmra.mxu0 %v310
    %v324 = vpop.f32.mrf.mxu0
    %v325 = vadd.f32 0.0, %v324
    %v326 = vpop.f32.mrf.mxu0
    %v327 = vadd.f32 0.0, %v326
    %328 = vdwg.mxu0
    %v329 = vmul.f32 %v301, 0.35355338
    %v330 = vmul.f32 %v303, 0.35355338
    %v331 = vmul.f32 %v325, 0.35355338
    %v332 = vmul.f32 %v327, 0.35355338
    %v333 = vadd.f32 %v329, %v174
    %v334 = vadd.f32 %v330, %v174
    %v335 = vadd.f32 %v331, %v174
    %v336 = vadd.f32 %v332, %v174
    %v337 = vsel %vm180, %v333, -inf
    %338 = vmax.xlane.f32.xlu0 %v337
    %v339 = vpop.xlane.xlu0 %338
    %v340 = vsel %vm180, %v334, -inf
    %341 = vmax.xlane.f32.xlu0 %v340
    %v342 = vpop.xlane.xlu0 %341
    %v343 = vsel %vm180, %v335, -inf
    %344 = vmax.xlane.f32.xlu0 %v343
    %v345 = vpop.xlane.xlu0 %344
    %v346 = vsel %vm180, %v336, -inf
    %347 = vmax.xlane.f32.xlu0 %v346
    %v348 = vpop.xlane.xlu0 %347
    %v349 = vsub.f32 %v333, %v339
    %v350 = vsub.f32 %v334, %v342
    %v351 = vsub.f32 %v335, %v345
    %v352 = vsub.f32 %v336, %v348
    %v353 = vmul.f32 %v349, 1.442695
    %v354 = vpow.pop %v353
    %v355 = vmul.f32 %v350, 1.442695
    %v356 = vpow.pop %v355
    %v357 = vmul.f32 %v351, 1.442695
    %v358 = vpow.pop %v357
    %v359 = vmul.f32 %v352, 1.442695
    %v360 = vpow.pop %v359
    %v361 = vsel %vm180, %v354, 0.0
    %362 = vadd.xlane.f32.xlu0 %v361
    %v363 = vpop.xlane.xlu0 %362
    %v364 = vsel %vm180, %v356, 0.0
    %365 = vadd.xlane.f32.xlu0 %v364
    %v366 = vpop.xlane.xlu0 %365
    %v367 = vsel %vm180, %v358, 0.0
    %368 = vadd.xlane.f32.xlu0 %v367
    %v369 = vpop.xlane.xlu0 %368
    %v370 = vsel %vm180, %v360, 0.0
    %371 = vadd.xlane.f32.xlu0 %v370
    %v372 = vpop.xlane.xlu0 %371
    %v373 = vrcp.pop %v363
    %v374 = vrcp.pop %v366
    %v375 = vrcp.pop %v369
    %v376 = vrcp.pop %v372
    %v377 = vmul.f32 %v354, %v373
    %v378 = vmul.f32 %v356, %v374
    %v379 = vmul.f32 %v358, %v375
    %v380 = vmul.f32 %v360, %v376
    %v381 = vpack.c.bf16 %v377, %v377
    %v382 = vpack.c.bf16 %v378, %v378
    %v383 = vpack.c.bf16 %v379, %v379
    %v384 = vpack.c.bf16 %v380, %v380
    %v387 = vunpack.c.l.b16 %v381
    %v388 = vunpack.c.l.b16 %v382
    %v389 = vpack.c.b16 %v388, %v387
    %390 = vrot.lane.b32.xlu0 %v118, 56
    %v391 = vpop.permute.xlu0 %390
    %v394 = vsel %vm180, %v389, 0
    %396 = vmatpush.bf16.msra.mxu0 0
    %397 = vmatpush.bf16.msra.mxu0 0
    %398 = vmatpush.bf16.msra.mxu0 0
    %399 = vmatpush.bf16.msra.mxu0 0
    %400 = vmatpush.bf16.msra.mxu0 0
    %401 = vmatpush.bf16.msra.mxu0 0
    %402 = vmatpush.bf16.msra.mxu0 0
    %403 = vmatpush.bf16.msra.mxu0 %v391
    %404 = vmatmul.bf16.gmra.mxu0 %v394
    %v405 = vpop.f32.mrf.mxu0
    %v406 = vadd.f32 0.0, %v405
    %v407 = vpop.f32.mrf.mxu0
    %v408 = vadd.f32 0.0, %v407
    %409 = vdwg.mxu0
    %v412 = vunpack.c.l.b16 %v383
    %v413 = vunpack.c.l.b16 %v384
    %v414 = vpack.c.b16 %v413, %v412
    %415 = vrot.lane.b32.xlu0 %v146, 56
    %v416 = vpop.permute.xlu0 %415
    %v419 = vsel %vm180, %v414, 0
    %421 = vmatpush.bf16.msra.mxu0 0
    %422 = vmatpush.bf16.msra.mxu0 0
    %423 = vmatpush.bf16.msra.mxu0 0
    %424 = vmatpush.bf16.msra.mxu0 0
    %425 = vmatpush.bf16.msra.mxu0 0
    %426 = vmatpush.bf16.msra.mxu0 0
    %427 = vmatpush.bf16.msra.mxu0 0
    %428 = vmatpush.bf16.msra.mxu0 %v416
    %429 = vmatmul.bf16.gmra.mxu0 %v419
    %v430 = vpop.f32.mrf.mxu0
    %v431 = vadd.f32 0.0, %v430
    %v432 = vpop.f32.mrf.mxu0
    %v433 = vadd.f32 0.0, %v432
    %434 = vdwg.mxu0
    %v435 = vpack.c.bf16 %v408, %v406
    %v436 = vpack.c.bf16 %v433, %v431
    %v437 = vpack.c.b16 %v77, %v77
    %438 = vrot.lane.b32.xlu0 %v437, 32
    %v439 = vpop.permute.xlu0 %438
    %v441 = vsel %vm121, %v435, 0
    %v444 = vsel %vm121, %v436, 0
    %vm446 = vcmask 1043456
    %v448 = vsel %vm446, %v439, 0
    %450 = vmatpush.bf16.msra.mxu0 0
    %451 = vmatpush.bf16.msra.mxu0 0
    %452 = vmatpush.bf16.msra.mxu0 0
    %453 = vmatpush.bf16.msra.mxu0 0
    %454 = vmatpush.bf16.msra.mxu0 0
    %455 = vmatpush.bf16.msra.mxu0 0
    %456 = vmatpush.bf16.msra.mxu0 0
    %457 = vmatpush.bf16.msra.mxu0 %v448
    %458 = vmatmul.bf16.gmra.mxu0 %v441
    %v459 = vpop.f32.mrf.mxu0
    %v460 = vadd.f32 0.0, %v459
    %v461 = vpop.f32.mrf.mxu0
    %v462 = vadd.f32 0.0, %v461
    %463 = vmatmul.bf16.gmra.mxu0 %v444
    %v464 = vpop.f32.mrf.mxu0
    %v465 = vadd.f32 0.0, %v464
    %v466 = vpop.f32.mrf.mxu0
    %v467 = vadd.f32 0.0, %v466
    %468 = vdwg.mxu0
    %v469 = vpack.c.b16 %v76, %v76
    %470 = vrot.lane.b32.xlu0 %v469, 32
    %v471 = vpop.permute.xlu0 %470
    %v473 = vsel %vm121, %v279, 0
    %v476 = vsel %vm121, %v280, 0
    %v479 = vsel %vm446, %v471, 0
    %481 = vmatpush.bf16.msra.mxu0 0
    %482 = vmatpush.bf16.msra.mxu0 0
    %483 = vmatpush.bf16.msra.mxu0 0
    %484 = vmatpush.bf16.msra.mxu0 0
    %485 = vmatpush.bf16.msra.mxu0 0
    %486 = vmatpush.bf16.msra.mxu0 0
    %487 = vmatpush.bf16.msra.mxu0 0
    %488 = vmatpush.bf16.msra.mxu0 %v479
    %489 = vmatmul.bf16.gmra.mxu0 %v473
    %v490 = vpop.f32.mrf.mxu0
    %v491 = vadd.f32 %v460, %v490
    %v492 = vpop.f32.mrf.mxu0
    %v493 = vadd.f32 %v462, %v492
    %494 = vmatmul.bf16.gmra.mxu0 %v476
    %v495 = vpop.f32.mrf.mxu0
    %v496 = vadd.f32 %v465, %v495
    %v497 = vpop.f32.mrf.mxu0
    %v498 = vadd.f32 %v467, %v497
    %499 = vdwg.mxu0
    %500 = vrot.lane.b32.xlu0 %v118, 112
    %v501 = vpop.permute.xlu0 %500
    %502 = vrot.lane.b32.xlu0 %v118, 80
    %v503 = vpop.permute.xlu0 %502
    %v505 = vsel %vm121, %v501, 0
    %v508 = vsel %vm121, %v503, 0
    %510 = vmatpush.bf16.xpose.msra.mxu0 0
    %511 = vmatpush.bf16.xpose.msra.mxu0 0
    %512 = vmatpush.bf16.xpose.msra.mxu0 0
    %513 = vmatpush.bf16.xpose.msra.mxu0 0
    %514 = vmatpush.bf16.xpose.msra.mxu0 0
    %515 = vmatpush.bf16.xpose.msra.mxu0 0
    %516 = vmatpush.bf16.xpose.msra.mxu0 0
    %517 = vmatpush.bf16.xpose.msra.mxu0 %v508
    %518 = vmatmul.bf16.gmra.mxu0 %v505
    %v519 = vpop.f32.mrf.mxu0
    %v520 = vadd.f32 0.0, %v519
    %v521 = vpop.f32.mrf.mxu0
    %v522 = vadd.f32 0.0, %v521
    %523 = vdwg.mxu0
    %524 = vrot.lane.b32.xlu0 %v146, 112
    %v525 = vpop.permute.xlu0 %524
    %526 = vrot.lane.b32.xlu0 %v146, 80
    %v527 = vpop.permute.xlu0 %526
    %v529 = vsel %vm121, %v525, 0
    %v532 = vsel %vm121, %v527, 0
    %534 = vmatpush.bf16.xpose.msra.mxu0 0
    %535 = vmatpush.bf16.xpose.msra.mxu0 0
    %536 = vmatpush.bf16.xpose.msra.mxu0 0
    %537 = vmatpush.bf16.xpose.msra.mxu0 0
    %538 = vmatpush.bf16.xpose.msra.mxu0 0
    %539 = vmatpush.bf16.xpose.msra.mxu0 0
    %540 = vmatpush.bf16.xpose.msra.mxu0 0
    %541 = vmatpush.bf16.xpose.msra.mxu0 %v532
    %542 = vmatmul.bf16.gmra.mxu0 %v529
    %v543 = vpop.f32.mrf.mxu0
    %v544 = vadd.f32 0.0, %v543
    %v545 = vpop.f32.mrf.mxu0
    %v546 = vadd.f32 0.0, %v545
    %547 = vdwg.mxu0
    %v548 = vmul.f32 %v520, 0.35355338
    %v549 = vmul.f32 %v522, 0.35355338
    %v550 = vmul.f32 %v544, 0.35355338
    %v551 = vmul.f32 %v546, 0.35355338
    %v552 = vadd.f32 %v548, %v174
    %v553 = vadd.f32 %v549, %v174
    %v554 = vadd.f32 %v550, %v174
    %v555 = vadd.f32 %v551, %v174
    %v556 = vsel %vm180, %v552, -inf
    %557 = vmax.xlane.f32.xlu0 %v556
    %v558 = vpop.xlane.xlu0 %557
    %v559 = vsel %vm180, %v553, -inf
    %560 = vmax.xlane.f32.xlu0 %v559
    %v561 = vpop.xlane.xlu0 %560
    %v562 = vsel %vm180, %v554, -inf
    %563 = vmax.xlane.f32.xlu0 %v562
    %v564 = vpop.xlane.xlu0 %563
    %v565 = vsel %vm180, %v555, -inf
    %566 = vmax.xlane.f32.xlu0 %v565
    %v567 = vpop.xlane.xlu0 %566
    %v568 = vsub.f32 %v552, %v558
    %v569 = vsub.f32 %v553, %v561
    %v570 = vsub.f32 %v554, %v564
    %v571 = vsub.f32 %v555, %v567
    %v572 = vmul.f32 %v568, 1.442695
    %v573 = vpow.pop %v572
    %v574 = vmul.f32 %v569, 1.442695
    %v575 = vpow.pop %v574
    %v576 = vmul.f32 %v570, 1.442695
    %v577 = vpow.pop %v576
    %v578 = vmul.f32 %v571, 1.442695
    %v579 = vpow.pop %v578
    %v580 = vsel %vm180, %v573, 0.0
    %581 = vadd.xlane.f32.xlu0 %v580
    %v582 = vpop.xlane.xlu0 %581
    %v583 = vsel %vm180, %v575, 0.0
    %584 = vadd.xlane.f32.xlu0 %v583
    %v585 = vpop.xlane.xlu0 %584
    %v586 = vsel %vm180, %v577, 0.0
    %587 = vadd.xlane.f32.xlu0 %v586
    %v588 = vpop.xlane.xlu0 %587
    %v589 = vsel %vm180, %v579, 0.0
    %590 = vadd.xlane.f32.xlu0 %v589
    %v591 = vpop.xlane.xlu0 %590
    %v592 = vrcp.pop %v582
    %v593 = vrcp.pop %v585
    %v594 = vrcp.pop %v588
    %v595 = vrcp.pop %v591
    %v596 = vmul.f32 %v573, %v592
    %v597 = vmul.f32 %v575, %v593
    %v598 = vmul.f32 %v577, %v594
    %v599 = vmul.f32 %v579, %v595
    %v600 = vpack.c.bf16 %v596, %v596
    %v601 = vpack.c.bf16 %v597, %v597
    %v602 = vpack.c.bf16 %v598, %v598
    %v603 = vpack.c.bf16 %v599, %v599
    %v606 = vunpack.c.l.b16 %v600
    %v607 = vunpack.c.l.b16 %v601
    %v608 = vpack.c.b16 %v607, %v606
    %609 = vrot.lane.b32.xlu0 %v118, 48
    %v610 = vpop.permute.xlu0 %609
    %v613 = vsel %vm180, %v608, 0
    %615 = vmatpush.bf16.msra.mxu0 0
    %616 = vmatpush.bf16.msra.mxu0 0
    %617 = vmatpush.bf16.msra.mxu0 0
    %618 = vmatpush.bf16.msra.mxu0 0
    %619 = vmatpush.bf16.msra.mxu0 0
    %620 = vmatpush.bf16.msra.mxu0 0
    %621 = vmatpush.bf16.msra.mxu0 0
    %622 = vmatpush.bf16.msra.mxu0 %v610
    %623 = vmatmul.bf16.gmra.mxu0 %v613
    %v624 = vpop.f32.mrf.mxu0
    %v625 = vadd.f32 0.0, %v624
    %v626 = vpop.f32.mrf.mxu0
    %v627 = vadd.f32 0.0, %v626
    %628 = vdwg.mxu0
    %v631 = vunpack.c.l.b16 %v602
    %v632 = vunpack.c.l.b16 %v603
    %v633 = vpack.c.b16 %v632, %v631
    %634 = vrot.lane.b32.xlu0 %v146, 48
    %v635 = vpop.permute.xlu0 %634
    %v638 = vsel %vm180, %v633, 0
    %640 = vmatpush.bf16.msra.mxu0 0
    %641 = vmatpush.bf16.msra.mxu0 0
    %642 = vmatpush.bf16.msra.mxu0 0
    %643 = vmatpush.bf16.msra.mxu0 0
    %644 = vmatpush.bf16.msra.mxu0 0
    %645 = vmatpush.bf16.msra.mxu0 0
    %646 = vmatpush.bf16.msra.mxu0 0
    %647 = vmatpush.bf16.msra.mxu0 %v635
    %648 = vmatmul.bf16.gmra.mxu0 %v638
    %v649 = vpop.f32.mrf.mxu0
    %v650 = vadd.f32 0.0, %v649
    %v651 = vpop.f32.mrf.mxu0
    %v652 = vadd.f32 0.0, %v651
    %653 = vdwg.mxu0
    %v654 = vpack.c.bf16 %v627, %v625
    %v655 = vpack.c.bf16 %v652, %v650
    %v656 = vpack.c.b16 %v78, %v78
    %657 = vrot.lane.b32.xlu0 %v656, 32
    %v658 = vpop.permute.xlu0 %657
    %v660 = vsel %vm121, %v654, 0
    %v663 = vsel %vm121, %v655, 0
    %v666 = vsel %vm446, %v658, 0
    %668 = vmatpush.bf16.msra.mxu0 0
    %669 = vmatpush.bf16.msra.mxu0 0
    %670 = vmatpush.bf16.msra.mxu0 0
    %671 = vmatpush.bf16.msra.mxu0 0
    %672 = vmatpush.bf16.msra.mxu0 0
    %673 = vmatpush.bf16.msra.mxu0 0
    %674 = vmatpush.bf16.msra.mxu0 0
    %675 = vmatpush.bf16.msra.mxu0 %v666
    %676 = vmatmul.bf16.gmra.mxu0 %v660
    %v677 = vpop.f32.mrf.mxu0
    %v678 = vadd.f32 0.0, %v677
    %v679 = vpop.f32.mrf.mxu0
    %v680 = vadd.f32 0.0, %v679
    %681 = vmatmul.bf16.gmra.mxu0 %v663
    %v682 = vpop.f32.mrf.mxu0
    %v683 = vadd.f32 0.0, %v682
    %v684 = vpop.f32.mrf.mxu0
    %v685 = vadd.f32 0.0, %v684
    %686 = vdwg.mxu0
    %v687 = vadd.f32 %v491, %v678
    %v688 = vadd.f32 %v493, %v680
    %v689 = vadd.f32 %v496, %v683
    %v690 = vadd.f32 %v498, %v685
    %691 = vrot.lane.b32.xlu0 %v118, 104
    %v692 = vpop.permute.xlu0 %691
    %693 = vrot.lane.b32.xlu0 %v118, 72
    %v694 = vpop.permute.xlu0 %693
    %v696 = vsel %vm121, %v692, 0
    %v699 = vsel %vm121, %v694, 0
    %701 = vmatpush.bf16.xpose.msra.mxu0 0
    %702 = vmatpush.bf16.xpose.msra.mxu0 0
    %703 = vmatpush.bf16.xpose.msra.mxu0 0
    %704 = vmatpush.bf16.xpose.msra.mxu0 0
    %705 = vmatpush.bf16.xpose.msra.mxu0 0
    %706 = vmatpush.bf16.xpose.msra.mxu0 0
    %707 = vmatpush.bf16.xpose.msra.mxu0 0
    %708 = vmatpush.bf16.xpose.msra.mxu0 %v699
    %709 = vmatmul.bf16.gmra.mxu0 %v696
    %v710 = vpop.f32.mrf.mxu0
    %v711 = vadd.f32 0.0, %v710
    %v712 = vpop.f32.mrf.mxu0
    %v713 = vadd.f32 0.0, %v712
    %714 = vdwg.mxu0
    %715 = vrot.lane.b32.xlu0 %v146, 104
    %v716 = vpop.permute.xlu0 %715
    %717 = vrot.lane.b32.xlu0 %v146, 72
    %v718 = vpop.permute.xlu0 %717
    %v720 = vsel %vm121, %v716, 0
    %v723 = vsel %vm121, %v718, 0
    %725 = vmatpush.bf16.xpose.msra.mxu0 0
    %726 = vmatpush.bf16.xpose.msra.mxu0 0
    %727 = vmatpush.bf16.xpose.msra.mxu0 0
    %728 = vmatpush.bf16.xpose.msra.mxu0 0
    %729 = vmatpush.bf16.xpose.msra.mxu0 0
    %730 = vmatpush.bf16.xpose.msra.mxu0 0
    %731 = vmatpush.bf16.xpose.msra.mxu0 0
    %732 = vmatpush.bf16.xpose.msra.mxu0 %v723
    %733 = vmatmul.bf16.gmra.mxu0 %v720
    %v734 = vpop.f32.mrf.mxu0
    %v735 = vadd.f32 0.0, %v734
    %v736 = vpop.f32.mrf.mxu0
    %v737 = vadd.f32 0.0, %v736
    %738 = vdwg.mxu0
    %v739 = vmul.f32 %v711, 0.35355338
    %v740 = vmul.f32 %v713, 0.35355338
    %v741 = vmul.f32 %v735, 0.35355338
    %v742 = vmul.f32 %v737, 0.35355338
    %v743 = vadd.f32 %v739, %v174
    %v744 = vadd.f32 %v740, %v174
    %v745 = vadd.f32 %v741, %v174
    %v746 = vadd.f32 %v742, %v174
    %v747 = vsel %vm180, %v743, -inf
    %748 = vmax.xlane.f32.xlu0 %v747
    %v749 = vpop.xlane.xlu0 %748
    %v750 = vsel %vm180, %v744, -inf
    %751 = vmax.xlane.f32.xlu0 %v750
    %v752 = vpop.xlane.xlu0 %751
    %v753 = vsel %vm180, %v745, -inf
    %754 = vmax.xlane.f32.xlu0 %v753
    %v755 = vpop.xlane.xlu0 %754
    %v756 = vsel %vm180, %v746, -inf
    %757 = vmax.xlane.f32.xlu0 %v756
    %v758 = vpop.xlane.xlu0 %757
    %v759 = vsub.f32 %v743, %v749
    %v760 = vsub.f32 %v744, %v752
    %v761 = vsub.f32 %v745, %v755
    %v762 = vsub.f32 %v746, %v758
    %v763 = vmul.f32 %v759, 1.442695
    %v764 = vpow.pop %v763
    %v765 = vmul.f32 %v760, 1.442695
    %v766 = vpow.pop %v765
    %v767 = vmul.f32 %v761, 1.442695
    %v768 = vpow.pop %v767
    %v769 = vmul.f32 %v762, 1.442695
    %v770 = vpow.pop %v769
    %v771 = vsel %vm180, %v764, 0.0
    %772 = vadd.xlane.f32.xlu0 %v771
    %v773 = vpop.xlane.xlu0 %772
    %v774 = vsel %vm180, %v766, 0.0
    %775 = vadd.xlane.f32.xlu0 %v774
    %v776 = vpop.xlane.xlu0 %775
    %v777 = vsel %vm180, %v768, 0.0
    %778 = vadd.xlane.f32.xlu0 %v777
    %v779 = vpop.xlane.xlu0 %778
    %v780 = vsel %vm180, %v770, 0.0
    %781 = vadd.xlane.f32.xlu0 %v780
    %v782 = vpop.xlane.xlu0 %781
    %v783 = vrcp.pop %v773
    %v784 = vrcp.pop %v776
    %v785 = vrcp.pop %v779
    %v786 = vrcp.pop %v782
    %v787 = vmul.f32 %v764, %v783
    %v788 = vmul.f32 %v766, %v784
    %v789 = vmul.f32 %v768, %v785
    %v790 = vmul.f32 %v770, %v786
    %v791 = vpack.c.bf16 %v787, %v787
    %v792 = vpack.c.bf16 %v788, %v788
    %v793 = vpack.c.bf16 %v789, %v789
    %v794 = vpack.c.bf16 %v790, %v790
    %v797 = vunpack.c.l.b16 %v791
    %v798 = vunpack.c.l.b16 %v792
    %v799 = vpack.c.b16 %v798, %v797
    %800 = vrot.lane.b32.xlu0 %v118, 40
    %v801 = vpop.permute.xlu0 %800
    %v804 = vsel %vm180, %v799, 0
    %806 = vmatpush.bf16.msra.mxu0 0
    %807 = vmatpush.bf16.msra.mxu0 0
    %808 = vmatpush.bf16.msra.mxu0 0
    %809 = vmatpush.bf16.msra.mxu0 0
    %810 = vmatpush.bf16.msra.mxu0 0
    %811 = vmatpush.bf16.msra.mxu0 0
    %812 = vmatpush.bf16.msra.mxu0 0
    %813 = vmatpush.bf16.msra.mxu0 %v801
    %814 = vmatmul.bf16.gmra.mxu0 %v804
    %v815 = vpop.f32.mrf.mxu0
    %v816 = vadd.f32 0.0, %v815
    %v817 = vpop.f32.mrf.mxu0
    %v818 = vadd.f32 0.0, %v817
    %819 = vdwg.mxu0
    %v822 = vunpack.c.l.b16 %v793
    %v823 = vunpack.c.l.b16 %v794
    %v824 = vpack.c.b16 %v823, %v822
    %825 = vrot.lane.b32.xlu0 %v146, 40
    %v826 = vpop.permute.xlu0 %825
    %v829 = vsel %vm180, %v824, 0
    %831 = vmatpush.bf16.msra.mxu0 0
    %832 = vmatpush.bf16.msra.mxu0 0
    %833 = vmatpush.bf16.msra.mxu0 0
    %834 = vmatpush.bf16.msra.mxu0 0
    %835 = vmatpush.bf16.msra.mxu0 0
    %836 = vmatpush.bf16.msra.mxu0 0
    %837 = vmatpush.bf16.msra.mxu0 0
    %838 = vmatpush.bf16.msra.mxu0 %v826
    %839 = vmatmul.bf16.gmra.mxu0 %v829
    %v840 = vpop.f32.mrf.mxu0
    %v841 = vadd.f32 0.0, %v840
    %v842 = vpop.f32.mrf.mxu0
    %v843 = vadd.f32 0.0, %v842
    %844 = vdwg.mxu0
    %v845 = vpack.c.bf16 %v818, %v816
    %v846 = vpack.c.bf16 %v843, %v841
    %v847 = vpack.c.b16 %v79, %v79
    %848 = vrot.lane.b32.xlu0 %v847, 32
    %v849 = vpop.permute.xlu0 %848
    %v851 = vsel %vm121, %v845, 0
    %v854 = vsel %vm121, %v846, 0
    %v857 = vsel %vm446, %v849, 0
    %859 = vmatpush.bf16.msra.mxu0 0
    %860 = vmatpush.bf16.msra.mxu0 0
    %861 = vmatpush.bf16.msra.mxu0 0
    %862 = vmatpush.bf16.msra.mxu0 0
    %863 = vmatpush.bf16.msra.mxu0 0
    %864 = vmatpush.bf16.msra.mxu0 0
    %865 = vmatpush.bf16.msra.mxu0 0
    %866 = vmatpush.bf16.msra.mxu0 %v857
    %867 = vmatmul.bf16.gmra.mxu0 %v851
    %v868 = vpop.f32.mrf.mxu0
    %v869 = vadd.f32 0.0, %v868
    %v870 = vpop.f32.mrf.mxu0
    %v871 = vadd.f32 0.0, %v870
    %872 = vmatmul.bf16.gmra.mxu0 %v854
    %v873 = vpop.f32.mrf.mxu0
    %v874 = vadd.f32 0.0, %v873
    %v875 = vpop.f32.mrf.mxu0
    %v876 = vadd.f32 0.0, %v875
    %877 = vdwg.mxu0
    %v878 = vadd.f32 %v687, %v869
    %v879 = vadd.f32 %v688, %v871
    %v880 = vadd.f32 %v689, %v874
    %v881 = vadd.f32 %v690, %v876
    %v882 = vperm.slane %v68, 1
    %v883 = vadd.f32 %v878, %v882
    %v884 = vadd.f32 %v879, %v882
    %v885 = vadd.f32 %v880, %v882
    %v886 = vadd.f32 %v881, %v882
    %v887 = vadd.f32 %v51, %v883
    %v888 = vadd.f32 %v52, %v884
    %v889 = vadd.f32 %v53, %v885
    %v890 = vadd.f32 %v54, %v886
    %v891 = vsel %vm84, %v887, 0.0
    %892 = vadd.xlane.f32.xlu0 %v891
    %v893 = vpop.xlane.xlu0 %892
    %v894 = vsel %vm84, %v888, 0.0
    %895 = vadd.xlane.f32.xlu0 %v894
    %v896 = vpop.xlane.xlu0 %895
    %v897 = vsel %vm84, %v889, 0.0
    %898 = vadd.xlane.f32.xlu0 %v897
    %v899 = vpop.xlane.xlu0 %898
    %v900 = vsel %vm84, %v890, 0.0
    %901 = vadd.xlane.f32.xlu0 %v900
    %v902 = vpop.xlane.xlu0 %901
    %v903 = vrcp.pop 32.0
    %v904 = vmul.f32 32.0, %v903
    %v905 = vsub.f32 1.0, %v904
    %v906 = vmul.f32 %v903, %v905
    %v907 = vadd.f32 %v903, %v906
    %vm908 = vweird.f32 %v903
    %v909 = vsel %vm908, %v903, %v907
    %v910 = vmul.f32 %v893, %v909
    %v911 = vmul.f32 %v896, %v909
    %v912 = vmul.f32 %v899, %v909
    %v913 = vmul.f32 %v902, %v909
    %v914 = vsub.f32 %v887, %v910
    %v915 = vsub.f32 %v888, %v911
    %v916 = vsub.f32 %v889, %v912
    %v917 = vsub.f32 %v890, %v913
    %v918 = vmul.f32 %v914, %v914
    %v919 = vmul.f32 %v915, %v915
    %v920 = vmul.f32 %v916, %v916
    %v921 = vmul.f32 %v917, %v917
    %v922 = vsel %vm84, %v918, 0.0
    %923 = vadd.xlane.f32.xlu0 %v922
    %v924 = vpop.xlane.xlu0 %923
    %v925 = vsel %vm84, %v919, 0.0
    %926 = vadd.xlane.f32.xlu0 %v925
    %v927 = vpop.xlane.xlu0 %926
    %v928 = vsel %vm84, %v920, 0.0
    %929 = vadd.xlane.f32.xlu0 %v928
    %v930 = vpop.xlane.xlu0 %929
    %v931 = vsel %vm84, %v921, 0.0
    %932 = vadd.xlane.f32.xlu0 %v931
    %v933 = vpop.xlane.xlu0 %932
    %v934 = vmul.f32 %v924, %v909
    %v935 = vmul.f32 %v927, %v909
    %v936 = vmul.f32 %v930, %v909
    %v937 = vmul.f32 %v933, %v909
    %v938 = vadd.f32 %v934, 1e-05
    %v939 = vadd.f32 %v935, 1e-05
    %v940 = vadd.f32 %v936, 1e-05
    %v941 = vadd.f32 %v937, 1e-05
    %v942 = vrsqrt.pop %v938
    %v943 = vmul.f32 %v942, %v938
    %v944 = vmul.f32 %v943, %v942
    %v945 = vmul.f32 0.5, %v944
    %v946 = vsub.f32 1.5, %v945
    %v947 = vmul.f32 %v942, %v946
    %vm948 = vweird.f32 %v938
    %vm949 = vweird.f32 %v942
    %vm950 = vmor %vm948, %vm949
    %v951 = vsel %vm950, %v942, %v947
    %v952 = vrsqrt.pop %v939
    %v953 = vmul.f32 %v952, %v939
    %v954 = vmul.f32 %v953, %v952
    %v955 = vmul.f32 0.5, %v954
    %v956 = vsub.f32 1.5, %v955
    %v957 = vmul.f32 %v952, %v956
    %vm958 = vweird.f32 %v939
    %vm959 = vweird.f32 %v952
    %vm960 = vmor %vm958, %vm959
    %v961 = vsel %vm960, %v952, %v957
    %v962 = vrsqrt.pop %v940
    %v963 = vmul.f32 %v962, %v940
    %v964 = vmul.f32 %v963, %v962
    %v965 = vmul.f32 0.5, %v964
    %v966 = vsub.f32 1.5, %v965
    %v967 = vmul.f32 %v962, %v966
    %vm968 = vweird.f32 %v940
    %vm969 = vweird.f32 %v962
    %vm970 = vmor %vm968, %vm969
    %v971 = vsel %vm970, %v962, %v967
    %v972 = vrsqrt.pop %v941
    %v973 = vmul.f32 %v972, %v941
    %v974 = vmul.f32 %v973, %v972
    %v975 = vmul.f32 0.5, %v974
    %v976 = vsub.f32 1.5, %v975
    %v977 = vmul.f32 %v972, %v976
    %vm978 = vweird.f32 %v941
    %vm979 = vweird.f32 %v972
    %vm980 = vmor %vm978, %vm979
    %v981 = vsel %vm980, %v972, %v977
    %v982 = vmul.f32 %v914, %v951
    %v983 = vmul.f32 %v915, %v961
    %v984 = vmul.f32 %v916, %v971
    %v985 = vmul.f32 %v917, %v981
    %v986 = vperm.slane %v68, 2
    %v987 = vmul.f32 %v982, %v986
    %v988 = vmul.f32 %v983, %v986
    %v989 = vmul.f32 %v984, %v986
    %v990 = vmul.f32 %v985, %v986
    %v991 = vperm.slane %v68, 3
    %v992 = vadd.f32 %v987, %v991
    %v993 = vadd.f32 %v988, %v991
    %v994 = vadd.f32 %v989, %v991
    %v995 = vadd.f32 %v990, %v991
    %v996 = vpack.c.bf16 %v993, %v992
    %v997 = vpack.c.bf16 %v995, %v994
    %v998 = vperm.slane %v68, 4
    %v999 = vunpack.c.h.b16 %v56
    %v1000 = vunpack.c.h.b16 %v57
    %v1001 = vunpack.c.h.b16 %v58
    %v1002 = vunpack.c.h.b16 %v59
    %v1003 = vpack.c.b16 %v1000, %v999
    %v1004 = vpack.c.b16 %v1002, %v1001
    %v1008 = vsel %vm84, %v996, 0
    %v1011 = vsel %vm84, %v997, 0
    %1013 = vmatpush.bf16.msra.mxu0 0
    %1014 = vmatpush.bf16.msra.mxu0 0
    %1015 = vmatpush.bf16.msra.mxu0 0
    %1016 = vmatpush.bf16.msra.mxu0 0
    %1017 = vmatpush.bf16.msra.mxu0 0
    %1018 = vmatpush.bf16.msra.mxu0 0
    %1019 = vmatpush.bf16.msra.mxu0 %v1004
    %1020 = vmatpush.bf16.msra.mxu0 %v1003
    %1021 = vmatmul.bf16.gmra.mxu0 %v1008
    %v1022 = vpop.f32.mrf.mxu0
    %v1023 = vadd.f32 %v998, %v1022
    %v1024 = vpop.f32.mrf.mxu0
    %v1025 = vadd.f32 %v998, %v1024
    %1026 = vmatmul.bf16.gmra.mxu0 %v1011
    %v1027 = vpop.f32.mrf.mxu0
    %v1028 = vadd.f32 %v998, %v1027
    %v1029 = vpop.f32.mrf.mxu0
    %v1030 = vadd.f32 %v998, %v1029
    %1031 = vdwg.mxu0
    %v1032 = vmax.f32 %v1023, 0.0
    %v1033 = vmax.f32 %v1025, 0.0
    %v1034 = vmax.f32 %v1028, 0.0
    %v1035 = vmax.f32 %v1030, 0.0
    %v1036 = vpack.c.bf16 %v1033, %v1032
    %v1037 = vpack.c.bf16 %v1035, %v1034
    %v1038 = vperm.slane %v68, 5
    %v1047 = vunpack.c.l.b16 %v60
    %v1048 = vunpack.c.l.b16 %v61
    %v1049 = vunpack.c.l.b16 %v62
    %v1050 = vunpack.c.l.b16 %v63
    %v1051 = vunpack.c.l.b16 %v64
    %v1052 = vunpack.c.l.b16 %v65
    %v1053 = vunpack.c.l.b16 %v66
    %v1054 = vunpack.c.l.b16 %v67
    %v1055 = vpack.c.b16 %v1048, %v1047
    %v1056 = vpack.c.b16 %v1050, %v1049
    %v1057 = vpack.c.b16 %v1052, %v1051
    %v1058 = vpack.c.b16 %v1054, %v1053
    %vm1063 = vcmask 523264
    %v1065 = vsel %vm1063, %v1036, 0
    %v1068 = vsel %vm1063, %v1037, 0
    %1070 = vmatpush.bf16.msra.mxu0 0
    %1071 = vmatpush.bf16.msra.mxu0 0
    %1072 = vmatpush.bf16.msra.mxu0 0
    %1073 = vmatpush.bf16.msra.mxu0 0
    %1074 = vmatpush.bf16.msra.mxu0 %v1058
    %1075 = vmatpush.bf16.msra.mxu0 %v1057
    %1076 = vmatpush.bf16.msra.mxu0 %v1056
    %1077 = vmatpush.bf16.msra.mxu0 %v1055
    %1078 = vmatmul.bf16.gmra.mxu0 %v1065
    %v1079 = vpop.f32.mrf.mxu0
    %v1080 = vadd.f32 %v1038, %v1079
    %v1081 = vpop.f32.mrf.mxu0
    %v1082 = vadd.f32 %v1038, %v1081
    %1083 = vmatmul.bf16.gmra.mxu0 %v1068
    %v1084 = vpop.f32.mrf.mxu0
    %v1085 = vadd.f32 %v1038, %v1084
    %v1086 = vpop.f32.mrf.mxu0
    %v1087 = vadd.f32 %v1038, %v1086
    %1088 = vdwg.mxu0
    %v1089 = vadd.f32 %v992, %v1080
    %v1090 = vadd.f32 %v993, %v1082
    %v1091 = vadd.f32 %v994, %v1085
    %v1092 = vadd.f32 %v995, %v1087
    %v1093 = vsel %vm84, %v1089, 0.0
    %1094 = vadd.xlane.f32.xlu0 %v1093
    %v1095 = vpop.xlane.xlu0 %1094
    %v1096 = vsel %vm84, %v1090, 0.0
    %1097 = vadd.xlane.f32.xlu0 %v1096
    %v1098 = vpop.xlane.xlu0 %1097
    %v1099 = vsel %vm84, %v1091, 0.0
    %1100 = vadd.xlane.f32.xlu0 %v1099
    %v1101 = vpop.xlane.xlu0 %1100
    %v1102 = vsel %vm84, %v1092, 0.0
    %1103 = vadd.xlane.f32.xlu0 %v1102
    %v1104 = vpop.xlane.xlu0 %1103
    %v1105 = vmul.f32 %v1095, %v909
    %v1106 = vmul.f32 %v1098, %v909
    %v1107 = vmul.f32 %v1101, %v909
    %v1108 = vmul.f32 %v1104, %v909
    %v1109 = vsub.f32 %v1089, %v1105
    %v1110 = vsub.f32 %v1090, %v1106
    %v1111 = vsub.f32 %v1091, %v1107
    %v1112 = vsub.f32 %v1092, %v1108
    %v1113 = vmul.f32 %v1109, %v1109
    %v1114 = vmul.f32 %v1110, %v1110
    %v1115 = vmul.f32 %v1111, %v1111
    %v1116 = vmul.f32 %v1112, %v1112
    %v1117 = vsel %vm84, %v1113, 0.0
    %1118 = vadd.xlane.f32.xlu0 %v1117
    %v1119 = vpop.xlane.xlu0 %1118
    %v1120 = vsel %vm84, %v1114, 0.0
    %1121 = vadd.xlane.f32.xlu0 %v1120
    %v1122 = vpop.xlane.xlu0 %1121
    %v1123 = vsel %vm84, %v1115, 0.0
    %1124 = vadd.xlane.f32.xlu0 %v1123
    %v1125 = vpop.xlane.xlu0 %1124
    %v1126 = vsel %vm84, %v1116, 0.0
    %1127 = vadd.xlane.f32.xlu0 %v1126
    %v1128 = vpop.xlane.xlu0 %1127
    %v1129 = vmul.f32 %v1119, %v909
    %v1130 = vmul.f32 %v1122, %v909
    %v1131 = vmul.f32 %v1125, %v909
    %v1132 = vmul.f32 %v1128, %v909
    %v1133 = vadd.f32 %v1129, 1e-05
    %v1134 = vadd.f32 %v1130, 1e-05
    %v1135 = vadd.f32 %v1131, 1e-05
    %v1136 = vadd.f32 %v1132, 1e-05
    %v1137 = vrsqrt.pop %v1133
    %v1138 = vmul.f32 %v1137, %v1133
    %v1139 = vmul.f32 %v1138, %v1137
    %v1140 = vmul.f32 0.5, %v1139
    %v1141 = vsub.f32 1.5, %v1140
    %v1142 = vmul.f32 %v1137, %v1141
    %vm1143 = vweird.f32 %v1133
    %vm1144 = vweird.f32 %v1137
    %vm1145 = vmor %vm1143, %vm1144
    %v1146 = vsel %vm1145, %v1137, %v1142
    %v1147 = vrsqrt.pop %v1134
    %v1148 = vmul.f32 %v1147, %v1134
    %v1149 = vmul.f32 %v1148, %v1147
    %v1150 = vmul.f32 0.5, %v1149
    %v1151 = vsub.f32 1.5, %v1150
    %v1152 = vmul.f32 %v1147, %v1151
    %vm1153 = vweird.f32 %v1134
    %vm1154 = vweird.f32 %v1147
    %vm1155 = vmor %vm1153, %vm1154
    %v1156 = vsel %vm1155, %v1147, %v1152
    %v1157 = vrsqrt.pop %v1135
    %v1158 = vmul.f32 %v1157, %v1135
    %v1159 = vmul.f32 %v1158, %v1157
    %v1160 = vmul.f32 0.5, %v1159
    %v1161 = vsub.f32 1.5, %v1160
    %v1162 = vmul.f32 %v1157, %v1161
    %vm1163 = vweird.f32 %v1135
    %vm1164 = vweird.f32 %v1157
    %vm1165 = vmor %vm1163, %vm1164
    %v1166 = vsel %vm1165, %v1157, %v1162
    %v1167 = vrsqrt.pop %v1136
    %v1168 = vmul.f32 %v1167, %v1136
    %v1169 = vmul.f32 %v1168, %v1167
    %v1170 = vmul.f32 0.5, %v1169
    %v1171 = vsub.f32 1.5, %v1170
    %v1172 = vmul.f32 %v1167, %v1171
    %vm1173 = vweird.f32 %v1136
    %vm1174 = vweird.f32 %v1167
    %vm1175 = vmor %vm1173, %vm1174
    %v1176 = vsel %vm1175, %v1167, %v1172
    %v1177 = vmul.f32 %v1109, %v1146
    %v1178 = vmul.f32 %v1110, %v1156
    %v1179 = vmul.f32 %v1111, %v1166
    %v1180 = vmul.f32 %v1112, %v1176
    %v1181 = vperm.slane %v68, 6
    %v1182 = vmul.f32 %v1177, %v1181
    %v1183 = vmul.f32 %v1178, %v1181
    %v1184 = vmul.f32 %v1179, %v1181
    %v1185 = vmul.f32 %v1180, %v1181
    %v1186 = vperm.slane %v68, 7
    %v1187 = vadd.f32 %v1182, %v1186
    %v1188 = vadd.f32 %v1183, %v1186
    %v1189 = vadd.f32 %v1184, %v1186
    %v1190 = vadd.f32 %v1185, %v1186
    %s1191 = scalar_lea.vmem %s2, 32
    %v1192 = vld [vmem:[%s1191] sm:$0xff]
    %v1193 = vld [vmem:[%s1191 + $0x8] sm:$0xff]
    %v1194 = vld [vmem:[%s1191 + $0x10] sm:$0xff]
    %v1195 = vld [vmem:[%s1191 + $0x18] sm:$0xff]
    %s1196 = scalar_lea.vmem %s3, 32
    %v1197 = vld [vmem:[%s1196] sm:$0xf]
    %v1198 = vld [vmem:[%s1196 + $0x4] sm:$0xf]
    %v1199 = vld [vmem:[%s1196 + $0x8] sm:$0xf]
    %v1200 = vld [vmem:[%s1196 + $0xc] sm:$0xf]
    %v1201 = vld [vmem:[%s1196 + $0x10] sm:$0xf]
    %v1202 = vld [vmem:[%s1196 + $0x14] sm:$0xf]
    %v1203 = vld [vmem:[%s1196 + $0x18] sm:$0xf]
    %v1204 = vld [vmem:[%s1196 + $0x1c] sm:$0xf]
    %s1205 = scalar_lea.vmem [#allocation3], 8
    %v1206 = vld [vmem:[%s1205] sm:$0xff]
    %v1207 = vpack.c.bf16 %v1188, %v1187
    %v1208 = vpack.c.bf16 %v1190, %v1189
    %v1209 = vperm.slane %v1206, 0
    %v1214 = vunpack.c.l.b16 %v1192
    %v1215 = vunpack.c.l.b16 %v1193
    %v1216 = vunpack.c.l.b16 %v1194
    %v1217 = vunpack.c.l.b16 %v1195
    %v1218 = vpack.c.b16 %v1215, %v1214
    %v1219 = vpack.c.b16 %v1217, %v1216
    %v1223 = vsel %vm84, %v1207, 0
    %v1226 = vsel %vm84, %v1208, 0
    %1228 = vmatpush.bf16.msra.mxu0 0
    %1229 = vmatpush.bf16.msra.mxu0 0
    %1230 = vmatpush.bf16.msra.mxu0 0
    %1231 = vmatpush.bf16.msra.mxu0 0
    %1232 = vmatpush.bf16.msra.mxu0 0
    %1233 = vmatpush.bf16.msra.mxu0 0
    %1234 = vmatpush.bf16.msra.mxu0 %v1219
    %1235 = vmatpush.bf16.msra.mxu0 %v1218
    %1236 = vmatmul.bf16.gmra.mxu0 %v1223
    %v1237 = vpop.f32.mrf.mxu0
    %v1238 = vadd.f32 %v1209, %v1237
    %v1239 = vpop.f32.mrf.mxu0
    %v1240 = vadd.f32 %v1209, %v1239
    %1241 = vmatmul.bf16.gmra.mxu0 %v1226
    %v1242 = vpop.f32.mrf.mxu0
    %v1243 = vadd.f32 %v1209, %v1242
    %v1244 = vpop.f32.mrf.mxu0
    %v1245 = vadd.f32 %v1209, %v1244
    %1246 = vdwg.mxu0
    %v1247 = vpack.c.bf16 %v1238, %v1238
    %v1248 = vpack.c.bf16 %v1240, %v1240
    %v1249 = vpack.c.bf16 %v1243, %v1243
    %v1250 = vpack.c.bf16 %v1245, %v1245
    %v1253 = vunpack.c.l.b16 %v1247
    %v1254 = vunpack.c.l.b16 %v1248
    %v1255 = vpack.c.b16 %v1254, %v1253
    %1256 = vrot.lane.b32.xlu0 %v1255, 96
    %v1257 = vpop.permute.xlu0 %1256
    %v1259 = vsel %vm121, %v1255, 0
    %v1262 = vsel %vm121, %v1257, 0
    %1264 = vmatpush.bf16.xpose.msra.mxu0 0
    %1265 = vmatpush.bf16.xpose.msra.mxu0 0
    %1266 = vmatpush.bf16.xpose.msra.mxu0 0
    %1267 = vmatpush.bf16.xpose.msra.mxu0 0
    %1268 = vmatpush.bf16.xpose.msra.mxu0 0
    %1269 = vmatpush.bf16.xpose.msra.mxu0 0
    %1270 = vmatpush.bf16.xpose.msra.mxu0 0
    %1271 = vmatpush.bf16.xpose.msra.mxu0 %v1262
    %1272 = vmatmul.bf16.gmra.mxu0 %v1259
    %v1273 = vpop.f32.mrf.mxu0
    %v1274 = vadd.f32 0.0, %v1273
    %v1275 = vpop.f32.mrf.mxu0
    %v1276 = vadd.f32 0.0, %v1275
    %1277 = vdwg.mxu0
    %v1280 = vunpack.c.l.b16 %v1249
    %v1281 = vunpack.c.l.b16 %v1250
    %v1282 = vpack.c.b16 %v1281, %v1280
    %1283 = vrot.lane.b32.xlu0 %v1282, 96
    %v1284 = vpop.permute.xlu0 %1283
    %v1286 = vsel %vm121, %v1282, 0
    %v1289 = vsel %vm121, %v1284, 0
    %1291 = vmatpush.bf16.xpose.msra.mxu0 0
    %1292 = vmatpush.bf16.xpose.msra.mxu0 0
    %1293 = vmatpush.bf16.xpose.msra.mxu0 0
    %1294 = vmatpush.bf16.xpose.msra.mxu0 0
    %1295 = vmatpush.bf16.xpose.msra.mxu0 0
    %1296 = vmatpush.bf16.xpose.msra.mxu0 0
    %1297 = vmatpush.bf16.xpose.msra.mxu0 0
    %1298 = vmatpush.bf16.xpose.msra.mxu0 %v1289
    %1299 = vmatmul.bf16.gmra.mxu0 %v1286
    %v1300 = vpop.f32.mrf.mxu0
    %v1301 = vadd.f32 0.0, %v1300
    %v1302 = vpop.f32.mrf.mxu0
    %v1303 = vadd.f32 0.0, %v1302
    %1304 = vdwg.mxu0
    %v1305 = vmul.f32 %v1274, 0.35355338
    %v1306 = vmul.f32 %v1276, 0.35355338
    %v1307 = vmul.f32 %v1301, 0.35355338
    %v1308 = vmul.f32 %v1303, 0.35355338
    %v1309 = vadd.f32 %v1305, %v174
    %v1310 = vadd.f32 %v1306, %v174
    %v1311 = vadd.f32 %v1307, %v174
    %v1312 = vadd.f32 %v1308, %v174
    %v1313 = vsel %vm180, %v1309, -inf
    %1314 = vmax.xlane.f32.xlu0 %v1313
    %v1315 = vpop.xlane.xlu0 %1314
    %v1316 = vsel %vm180, %v1310, -inf
    %1317 = vmax.xlane.f32.xlu0 %v1316
    %v1318 = vpop.xlane.xlu0 %1317
    %v1319 = vsel %vm180, %v1311, -inf
    %1320 = vmax.xlane.f32.xlu0 %v1319
    %v1321 = vpop.xlane.xlu0 %1320
    %v1322 = vsel %vm180, %v1312, -inf
    %1323 = vmax.xlane.f32.xlu0 %v1322
    %v1324 = vpop.xlane.xlu0 %1323
    %v1325 = vsub.f32 %v1309, %v1315
    %v1326 = vsub.f32 %v1310, %v1318
    %v1327 = vsub.f32 %v1311, %v1321
    %v1328 = vsub.f32 %v1312, %v1324
    %v1329 = vmul.f32 %v1325, 1.442695
    %v1330 = vpow.pop %v1329
    %v1331 = vmul.f32 %v1326, 1.442695
    %v1332 = vpow.pop %v1331
    %v1333 = vmul.f32 %v1327, 1.442695
    %v1334 = vpow.pop %v1333
    %v1335 = vmul.f32 %v1328, 1.442695
    %v1336 = vpow.pop %v1335
    %v1337 = vsel %vm180, %v1330, 0.0
    %1338 = vadd.xlane.f32.xlu0 %v1337
    %v1339 = vpop.xlane.xlu0 %1338
    %v1340 = vsel %vm180, %v1332, 0.0
    %1341 = vadd.xlane.f32.xlu0 %v1340
    %v1342 = vpop.xlane.xlu0 %1341
    %v1343 = vsel %vm180, %v1334, 0.0
    %1344 = vadd.xlane.f32.xlu0 %v1343
    %v1345 = vpop.xlane.xlu0 %1344
    %v1346 = vsel %vm180, %v1336, 0.0
    %1347 = vadd.xlane.f32.xlu0 %v1346
    %v1348 = vpop.xlane.xlu0 %1347
    %v1349 = vrcp.pop %v1339
    %v1350 = vrcp.pop %v1342
    %v1351 = vrcp.pop %v1345
    %v1352 = vrcp.pop %v1348
    %v1353 = vmul.f32 %v1330, %v1349
    %v1354 = vmul.f32 %v1332, %v1350
    %v1355 = vmul.f32 %v1334, %v1351
    %v1356 = vmul.f32 %v1336, %v1352
    %v1357 = vpack.c.bf16 %v1353, %v1353
    %v1358 = vpack.c.bf16 %v1354, %v1354
    %v1359 = vpack.c.bf16 %v1355, %v1355
    %v1360 = vpack.c.bf16 %v1356, %v1356
    %v1363 = vunpack.c.l.b16 %v1357
    %v1364 = vunpack.c.l.b16 %v1358
    %v1365 = vpack.c.b16 %v1364, %v1363
    %1366 = vrot.lane.b32.xlu0 %v1255, 64
    %v1367 = vpop.permute.xlu0 %1366
    %v1370 = vsel %vm180, %v1365, 0
    %1372 = vmatpush.bf16.msra.mxu0 0
    %1373 = vmatpush.bf16.msra.mxu0 0
    %1374 = vmatpush.bf16.msra.mxu0 0
    %1375 = vmatpush.bf16.msra.mxu0 0
    %1376 = vmatpush.bf16.msra.mxu0 0
    %1377 = vmatpush.bf16.msra.mxu0 0
    %1378 = vmatpush.bf16.msra.mxu0 0
    %1379 = vmatpush.bf16.msra.mxu0 %v1367
    %1380 = vmatmul.bf16.gmra.mxu0 %v1370
    %v1381 = vpop.f32.mrf.mxu0
    %v1382 = vadd.f32 0.0, %v1381
    %v1383 = vpop.f32.mrf.mxu0
    %v1384 = vadd.f32 0.0, %v1383
    %1385 = vdwg.mxu0
    %v1388 = vunpack.c.l.b16 %v1359
    %v1389 = vunpack.c.l.b16 %v1360
    %v1390 = vpack.c.b16 %v1389, %v1388
    %1391 = vrot.lane.b32.xlu0 %v1282, 64
    %v1392 = vpop.permute.xlu0 %1391
    %v1395 = vsel %vm180, %v1390, 0
    %1397 = vmatpush.bf16.msra.mxu0 0
    %1398 = vmatpush.bf16.msra.mxu0 0
    %1399 = vmatpush.bf16.msra.mxu0 0
    %1400 = vmatpush.bf16.msra.mxu0 0
    %1401 = vmatpush.bf16.msra.mxu0 0
    %1402 = vmatpush.bf16.msra.mxu0 0
    %1403 = vmatpush.bf16.msra.mxu0 0
    %1404 = vmatpush.bf16.msra.mxu0 %v1392
    %1405 = vmatmul.bf16.gmra.mxu0 %v1395
    %v1406 = vpop.f32.mrf.mxu0
    %v1407 = vadd.f32 0.0, %v1406
    %v1408 = vpop.f32.mrf.mxu0
    %v1409 = vadd.f32 0.0, %v1408
    %1410 = vdwg.mxu0
    %v1411 = vpack.c.bf16 %v1384, %v1382
    %v1412 = vpack.c.bf16 %v1409, %v1407
    %1413 = vrot.lane.b32.xlu0 %v1255, 120
    %v1414 = vpop.permute.xlu0 %1413
    %1415 = vrot.lane.b32.xlu0 %v1255, 88
    %v1416 = vpop.permute.xlu0 %1415
    %v1418 = vsel %vm121, %v1414, 0
    %v1421 = vsel %vm121, %v1416, 0
    %1423 = vmatpush.bf16.xpose.msra.mxu0 0
    %1424 = vmatpush.bf16.xpose.msra.mxu0 0
    %1425 = vmatpush.bf16.xpose.msra.mxu0 0
    %1426 = vmatpush.bf16.xpose.msra.mxu0 0
    %1427 = vmatpush.bf16.xpose.msra.mxu0 0
    %1428 = vmatpush.bf16.xpose.msra.mxu0 0
    %1429 = vmatpush.bf16.xpose.msra.mxu0 0
    %1430 = vmatpush.bf16.xpose.msra.mxu0 %v1421
    %1431 = vmatmul.bf16.gmra.mxu0 %v1418
    %v1432 = vpop.f32.mrf.mxu0
    %v1433 = vadd.f32 0.0, %v1432
    %v1434 = vpop.f32.mrf.mxu0
    %v1435 = vadd.f32 0.0, %v1434
    %1436 = vdwg.mxu0
    %1437 = vrot.lane.b32.xlu0 %v1282, 120
    %v1438 = vpop.permute.xlu0 %1437
    %1439 = vrot.lane.b32.xlu0 %v1282, 88
    %v1440 = vpop.permute.xlu0 %1439
    %v1442 = vsel %vm121, %v1438, 0
    %v1445 = vsel %vm121, %v1440, 0
    %1447 = vmatpush.bf16.xpose.msra.mxu0 0
    %1448 = vmatpush.bf16.xpose.msra.mxu0 0
    %1449 = vmatpush.bf16.xpose.msra.mxu0 0
    %1450 = vmatpush.bf16.xpose.msra.mxu0 0
    %1451 = vmatpush.bf16.xpose.msra.mxu0 0
    %1452 = vmatpush.bf16.xpose.msra.mxu0 0
    %1453 = vmatpush.bf16.xpose.msra.mxu0 0
    %1454 = vmatpush.bf16.xpose.msra.mxu0 %v1445
    %1455 = vmatmul.bf16.gmra.mxu0 %v1442
    %v1456 = vpop.f32.mrf.mxu0
    %v1457 = vadd.f32 0.0, %v1456
    %v1458 = vpop.f32.mrf.mxu0
    %v1459 = vadd.f32 0.0, %v1458
    %1460 = vdwg.mxu0
    %v1461 = vmul.f32 %v1433, 0.35355338
    %v1462 = vmul.f32 %v1435, 0.35355338
    %v1463 = vmul.f32 %v1457, 0.35355338
    %v1464 = vmul.f32 %v1459, 0.35355338
    %v1465 = vadd.f32 %v1461, %v174
    %v1466 = vadd.f32 %v1462, %v174
    %v1467 = vadd.f32 %v1463, %v174
    %v1468 = vadd.f32 %v1464, %v174
    %v1469 = vsel %vm180, %v1465, -inf
    %1470 = vmax.xlane.f32.xlu0 %v1469
    %v1471 = vpop.xlane.xlu0 %1470
    %v1472 = vsel %vm180, %v1466, -inf
    %1473 = vmax.xlane.f32.xlu0 %v1472
    %v1474 = vpop.xlane.xlu0 %1473
    %v1475 = vsel %vm180, %v1467, -inf
    %1476 = vmax.xlane.f32.xlu0 %v1475
    %v1477 = vpop.xlane.xlu0 %1476
    %v1478 = vsel %vm180, %v1468, -inf
    %1479 = vmax.xlane.f32.xlu0 %v1478
    %v1480 = vpop.xlane.xlu0 %1479
    %v1481 = vsub.f32 %v1465, %v1471
    %v1482 = vsub.f32 %v1466, %v1474
    %v1483 = vsub.f32 %v1467, %v1477
    %v1484 = vsub.f32 %v1468, %v1480
    %v1485 = vmul.f32 %v1481, 1.442695
    %v1486 = vpow.pop %v1485
    %v1487 = vmul.f32 %v1482, 1.442695
    %v1488 = vpow.pop %v1487
    %v1489 = vmul.f32 %v1483, 1.442695
    %v1490 = vpow.pop %v1489
    %v1491 = vmul.f32 %v1484, 1.442695
    %v1492 = vpow.pop %v1491
    %v1493 = vsel %vm180, %v1486, 0.0
    %1494 = vadd.xlane.f32.xlu0 %v1493
    %v1495 = vpop.xlane.xlu0 %1494
    %v1496 = vsel %vm180, %v1488, 0.0
    %1497 = vadd.xlane.f32.xlu0 %v1496
    %v1498 = vpop.xlane.xlu0 %1497
    %v1499 = vsel %vm180, %v1490, 0.0
    %1500 = vadd.xlane.f32.xlu0 %v1499
    %v1501 = vpop.xlane.xlu0 %1500
    %v1502 = vsel %vm180, %v1492, 0.0
    %1503 = vadd.xlane.f32.xlu0 %v1502
    %v1504 = vpop.xlane.xlu0 %1503
    %v1505 = vrcp.pop %v1495
    %v1506 = vrcp.pop %v1498
    %v1507 = vrcp.pop %v1501
    %v1508 = vrcp.pop %v1504
    %v1509 = vmul.f32 %v1486, %v1505
    %v1510 = vmul.f32 %v1488, %v1506
    %v1511 = vmul.f32 %v1490, %v1507
    %v1512 = vmul.f32 %v1492, %v1508
    %v1513 = vpack.c.bf16 %v1509, %v1509
    %v1514 = vpack.c.bf16 %v1510, %v1510
    %v1515 = vpack.c.bf16 %v1511, %v1511
    %v1516 = vpack.c.bf16 %v1512, %v1512
    %v1519 = vunpack.c.l.b16 %v1513
    %v1520 = vunpack.c.l.b16 %v1514
    %v1521 = vpack.c.b16 %v1520, %v1519
    %1522 = vrot.lane.b32.xlu0 %v1255, 56
    %v1523 = vpop.permute.xlu0 %1522
    %v1526 = vsel %vm180, %v1521, 0
    %1528 = vmatpush.bf16.msra.mxu0 0
    %1529 = vmatpush.bf16.msra.mxu0 0
    %1530 = vmatpush.bf16.msra.mxu0 0
    %1531 = vmatpush.bf16.msra.mxu0 0
    %1532 = vmatpush.bf16.msra.mxu0 0
    %1533 = vmatpush.bf16.msra.mxu0 0
    %1534 = vmatpush.bf16.msra.mxu0 0
    %1535 = vmatpush.bf16.msra.mxu0 %v1523
    %1536 = vmatmul.bf16.gmra.mxu0 %v1526
    %v1537 = vpop.f32.mrf.mxu0
    %v1538 = vadd.f32 0.0, %v1537
    %v1539 = vpop.f32.mrf.mxu0
    %v1540 = vadd.f32 0.0, %v1539
    %1541 = vdwg.mxu0
    %v1544 = vunpack.c.l.b16 %v1515
    %v1545 = vunpack.c.l.b16 %v1516
    %v1546 = vpack.c.b16 %v1545, %v1544
    %1547 = vrot.lane.b32.xlu0 %v1282, 56
    %v1548 = vpop.permute.xlu0 %1547
    %v1551 = vsel %vm180, %v1546, 0
    %1553 = vmatpush.bf16.msra.mxu0 0
    %1554 = vmatpush.bf16.msra.mxu0 0
    %1555 = vmatpush.bf16.msra.mxu0 0
    %1556 = vmatpush.bf16.msra.mxu0 0
    %1557 = vmatpush.bf16.msra.mxu0 0
    %1558 = vmatpush.bf16.msra.mxu0 0
    %1559 = vmatpush.bf16.msra.mxu0 0
    %1560 = vmatpush.bf16.msra.mxu0 %v1548
    %1561 = vmatmul.bf16.gmra.mxu0 %v1551
    %v1562 = vpop.f32.mrf.mxu0
    %v1563 = vadd.f32 0.0, %v1562
    %v1564 = vpop.f32.mrf.mxu0
    %v1565 = vadd.f32 0.0, %v1564
    %1566 = vdwg.mxu0
    %v1567 = vpack.c.bf16 %v1540, %v1538
    %v1568 = vpack.c.bf16 %v1565, %v1563
    %v1569 = vpack.c.b16 %v1215, %v1215
    %1570 = vrot.lane.b32.xlu0 %v1569, 32
    %v1571 = vpop.permute.xlu0 %1570
    %v1573 = vsel %vm121, %v1567, 0
    %v1576 = vsel %vm121, %v1568, 0
    %v1579 = vsel %vm446, %v1571, 0
    %1581 = vmatpush.bf16.msra.mxu0 0
    %1582 = vmatpush.bf16.msra.mxu0 0
    %1583 = vmatpush.bf16.msra.mxu0 0
    %1584 = vmatpush.bf16.msra.mxu0 0
    %1585 = vmatpush.bf16.msra.mxu0 0
    %1586 = vmatpush.bf16.msra.mxu0 0
    %1587 = vmatpush.bf16.msra.mxu0 0
    %1588 = vmatpush.bf16.msra.mxu0 %v1579
    %1589 = vmatmul.bf16.gmra.mxu0 %v1573
    %v1590 = vpop.f32.mrf.mxu0
    %v1591 = vadd.f32 0.0, %v1590
    %v1592 = vpop.f32.mrf.mxu0
    %v1593 = vadd.f32 0.0, %v1592
    %1594 = vmatmul.bf16.gmra.mxu0 %v1576
    %v1595 = vpop.f32.mrf.mxu0
    %v1596 = vadd.f32 0.0, %v1595
    %v1597 = vpop.f32.mrf.mxu0
    %v1598 = vadd.f32 0.0, %v1597
    %1599 = vdwg.mxu0
    %v1600 = vpack.c.b16 %v1214, %v1214
    %1601 = vrot.lane.b32.xlu0 %v1600, 32
    %v1602 = vpop.permute.xlu0 %1601
    %v1604 = vsel %vm121, %v1411, 0
    %v1607 = vsel %vm121, %v1412, 0
    %v1610 = vsel %vm446, %v1602, 0
    %1612 = vmatpush.bf16.msra.mxu0 0
    %1613 = vmatpush.bf16.msra.mxu0 0
    %1614 = vmatpush.bf16.msra.mxu0 0
    %1615 = vmatpush.bf16.msra.mxu0 0
    %1616 = vmatpush.bf16.msra.mxu0 0
    %1617 = vmatpush.bf16.msra.mxu0 0
    %1618 = vmatpush.bf16.msra.mxu0 0
    %1619 = vmatpush.bf16.msra.mxu0 %v1610
    %1620 = vmatmul.bf16.gmra.mxu0 %v1604
    %v1621 = vpop.f32.mrf.mxu0
    %v1622 = vadd.f32 %v1591, %v1621
    %v1623 = vpop.f32.mrf.mxu0
    %v1624 = vadd.f32 %v1593, %v1623
    %1625 = vmatmul.bf16.gmra.mxu0 %v1607
    %v1626 = vpop.f32.mrf.mxu0
    %v1627 = vadd.f32 %v1596, %v1626
    %v1628 = vpop.f32.mrf.mxu0
    %v1629 = vadd.f32 %v1598, %v1628
    %1630 = vdwg.mxu0
    %1631 = vrot.lane.b32.xlu0 %v1255, 112
    %v1632 = vpop.permute.xlu0 %1631
    %1633 = vrot.lane.b32.xlu0 %v1255, 80
    %v1634 = vpop.permute.xlu0 %1633
    %v1636 = vsel %vm121, %v1632, 0
    %v1639 = vsel %vm121, %v1634, 0
    %1641 = vmatpush.bf16.xpose.msra.mxu0 0
    %1642 = vmatpush.bf16.xpose.msra.mxu0 0
    %1643 = vmatpush.bf16.xpose.msra.mxu0 0
    %1644 = vmatpush.bf16.xpose.msra.mxu0 0
    %1645 = vmatpush.bf16.xpose.msra.mxu0 0
    %1646 = vmatpush.bf16.xpose.msra.mxu0 0
    %1647 = vmatpush.bf16.xpose.msra.mxu0 0
    %1648 = vmatpush.bf16.xpose.msra.mxu0 %v1639
    %1649 = vmatmul.bf16.gmra.mxu0 %v1636
    %v1650 = vpop.f32.mrf.mxu0
    %v1651 = vadd.f32 0.0, %v1650
    %v1652 = vpop.f32.mrf.mxu0
    %v1653 = vadd.f32 0.0, %v1652
    %1654 = vdwg.mxu0
    %1655 = vrot.lane.b32.xlu0 %v1282, 112
    %v1656 = vpop.permute.xlu0 %1655
    %1657 = vrot.lane.b32.xlu0 %v1282, 80
    %v1658 = vpop.permute.xlu0 %1657
    %v1660 = vsel %vm121, %v1656, 0
    %v1663 = vsel %vm121, %v1658, 0
    %1665 = vmatpush.bf16.xpose.msra.mxu0 0
    %1666 = vmatpush.bf16.xpose.msra.mxu0 0
    %1667 = vmatpush.bf16.xpose.msra.mxu0 0
    %1668 = vmatpush.bf16.xpose.msra.mxu0 0
    %1669 = vmatpush.bf16.xpose.msra.mxu0 0
    %1670 = vmatpush.bf16.xpose.msra.mxu0 0
    %1671 = vmatpush.bf16.xpose.msra.mxu0 0
    %1672 = vmatpush.bf16.xpose.msra.mxu0 %v1663
    %1673 = vmatmul.bf16.gmra.mxu0 %v1660
    %v1674 = vpop.f32.mrf.mxu0
    %v1675 = vadd.f32 0.0, %v1674
    %v1676 = vpop.f32.mrf.mxu0
    %v1677 = vadd.f32 0.0, %v1676
    %1678 = vdwg.mxu0
    %v1679 = vmul.f32 %v1651, 0.35355338
    %v1680 = vmul.f32 %v1653, 0.35355338
    %v1681 = vmul.f32 %v1675, 0.35355338
    %v1682 = vmul.f32 %v1677, 0.35355338
    %v1683 = vadd.f32 %v1679, %v174
    %v1684 = vadd.f32 %v1680, %v174
    %v1685 = vadd.f32 %v1681, %v174
    %v1686 = vadd.f32 %v1682, %v174
    %v1687 = vsel %vm180, %v1683, -inf
    %1688 = vmax.xlane.f32.xlu0 %v1687
    %v1689 = vpop.xlane.xlu0 %1688
    %v1690 = vsel %vm180, %v1684, -inf
    %1691 = vmax.xlane.f32.xlu0 %v1690
    %v1692 = vpop.xlane.xlu0 %1691
    %v1693 = vsel %vm180, %v1685, -inf
    %1694 = vmax.xlane.f32.xlu0 %v1693
    %v1695 = vpop.xlane.xlu0 %1694
    %v1696 = vsel %vm180, %v1686, -inf
    %1697 = vmax.xlane.f32.xlu0 %v1696
    %v1698 = vpop.xlane.xlu0 %1697
    %v1699 = vsub.f32 %v1683, %v1689
    %v1700 = vsub.f32 %v1684, %v1692
    %v1701 = vsub.f32 %v1685, %v1695
    %v1702 = vsub.f32 %v1686, %v1698
    %v1703 = vmul.f32 %v1699, 1.442695
    %v1704 = vpow.pop %v1703
    %v1705 = vmul.f32 %v1700, 1.442695
    %v1706 = vpow.pop %v1705
    %v1707 = vmul.f32 %v1701, 1.442695
    %v1708 = vpow.pop %v1707
    %v1709 = vmul.f32 %v1702, 1.442695
    %v1710 = vpow.pop %v1709
    %v1711 = vsel %vm180, %v1704, 0.0
    %1712 = vadd.xlane.f32.xlu0 %v1711
    %v1713 = vpop.xlane.xlu0 %1712
    %v1714 = vsel %vm180, %v1706, 0.0
    %1715 = vadd.xlane.f32.xlu0 %v1714
    %v1716 = vpop.xlane.xlu0 %1715
    %v1717 = vsel %vm180, %v1708, 0.0
    %1718 = vadd.xlane.f32.xlu0 %v1717
    %v1719 = vpop.xlane.xlu0 %1718
    %v1720 = vsel %vm180, %v1710, 0.0
    %1721 = vadd.xlane.f32.xlu0 %v1720
    %v1722 = vpop.xlane.xlu0 %1721
    %v1723 = vrcp.pop %v1713
    %v1724 = vrcp.pop %v1716
    %v1725 = vrcp.pop %v1719
    %v1726 = vrcp.pop %v1722
    %v1727 = vmul.f32 %v1704, %v1723
    %v1728 = vmul.f32 %v1706, %v1724
    %v1729 = vmul.f32 %v1708, %v1725
    %v1730 = vmul.f32 %v1710, %v1726
    %v1731 = vpack.c.bf16 %v1727, %v1727
    %v1732 = vpack.c.bf16 %v1728, %v1728
    %v1733 = vpack.c.bf16 %v1729, %v1729
    %v1734 = vpack.c.bf16 %v1730, %v1730
    %v1737 = vunpack.c.l.b16 %v1731
    %v1738 = vunpack.c.l.b16 %v1732
    %v1739 = vpack.c.b16 %v1738, %v1737
    %1740 = vrot.lane.b32.xlu0 %v1255, 48
    %v1741 = vpop.permute.xlu0 %1740
    %v1744 = vsel %vm180, %v1739, 0
    %1746 = vmatpush.bf16.msra.mxu0 0
    %1747 = vmatpush.bf16.msra.mxu0 0
    %1748 = vmatpush.bf16.msra.mxu0 0
    %1749 = vmatpush.bf16.msra.mxu0 0
    %1750 = vmatpush.bf16.msra.mxu0 0
    %1751 = vmatpush.bf16.msra.mxu0 0
    %1752 = vmatpush.bf16.msra.mxu0 0
    %1753 = vmatpush.bf16.msra.mxu0 %v1741
    %1754 = vmatmul.bf16.gmra.mxu0 %v1744
    %v1755 = vpop.f32.mrf.mxu0
    %v1756 = vadd.f32 0.0, %v1755
    %v1757 = vpop.f32.mrf.mxu0
    %v1758 = vadd.f32 0.0, %v1757
    %1759 = vdwg.mxu0
    %v1762 = vunpack.c.l.b16 %v1733
    %v1763 = vunpack.c.l.b16 %v1734
    %v1764 = vpack.c.b16 %v1763, %v1762
    %1765 = vrot.lane.b32.xlu0 %v1282, 48
    %v1766 = vpop.permute.xlu0 %1765
    %v1769 = vsel %vm180, %v1764, 0
    %1771 = vmatpush.bf16.msra.mxu0 0
    %1772 = vmatpush.bf16.msra.mxu0 0
    %1773 = vmatpush.bf16.msra.mxu0 0
    %1774 = vmatpush.bf16.msra.mxu0 0
    %1775 = vmatpush.bf16.msra.mxu0 0
    %1776 = vmatpush.bf16.msra.mxu0 0
    %1777 = vmatpush.bf16.msra.mxu0 0
    %1778 = vmatpush.bf16.msra.mxu0 %v1766
    %1779 = vmatmul.bf16.gmra.mxu0 %v1769
    %v1780 = vpop.f32.mrf.mxu0
    %v1781 = vadd.f32 0.0, %v1780
    %v1782 = vpop.f32.mrf.mxu0
    %v1783 = vadd.f32 0.0, %v1782
    %1784 = vdwg.mxu0
    %v1785 = vpack.c.bf16 %v1758, %v1756
    %v1786 = vpack.c.bf16 %v1783, %v1781
    %v1787 = vpack.c.b16 %v1216, %v1216
    %1788 = vrot.lane.b32.xlu0 %v1787, 32
    %v1789 = vpop.permute.xlu0 %1788
    %v1791 = vsel %vm121, %v1785, 0
    %v1794 = vsel %vm121, %v1786, 0
    %v1797 = vsel %vm446, %v1789, 0
    %1799 = vmatpush.bf16.msra.mxu0 0
    %1800 = vmatpush.bf16.msra.mxu0 0
    %1801 = vmatpush.bf16.msra.mxu0 0
    %1802 = vmatpush.bf16.msra.mxu0 0
    %1803 = vmatpush.bf16.msra.mxu0 0
    %1804 = vmatpush.bf16.msra.mxu0 0
    %1805 = vmatpush.bf16.msra.mxu0 0
    %1806 = vmatpush.bf16.msra.mxu0 %v1797
    %1807 = vmatmul.bf16.gmra.mxu0 %v1791
    %v1808 = vpop.f32.mrf.mxu0
    %v1809 = vadd.f32 0.0, %v1808
    %v1810 = vpop.f32.mrf.mxu0
    %v1811 = vadd.f32 0.0, %v1810
    %1812 = vmatmul.bf16.gmra.mxu0 %v1794
    %v1813 = vpop.f32.mrf.mxu0
    %v1814 = vadd.f32 0.0, %v1813
    %v1815 = vpop.f32.mrf.mxu0
    %v1816 = vadd.f32 0.0, %v1815
    %1817 = vdwg.mxu0
    %v1818 = vadd.f32 %v1622, %v1809
    %v1819 = vadd.f32 %v1624, %v1811
    %v1820 = vadd.f32 %v1627, %v1814
    %v1821 = vadd.f32 %v1629, %v1816
    %1822 = vrot.lane.b32.xlu0 %v1255, 104
    %v1823 = vpop.permute.xlu0 %1822
    %1824 = vrot.lane.b32.xlu0 %v1255, 72
    %v1825 = vpop.permute.xlu0 %1824
    %v1827 = vsel %vm121, %v1823, 0
    %v1830 = vsel %vm121, %v1825, 0
    %1832 = vmatpush.bf16.xpose.msra.mxu0 0
    %1833 = vmatpush.bf16.xpose.msra.mxu0 0
    %1834 = vmatpush.bf16.xpose.msra.mxu0 0
    %1835 = vmatpush.bf16.xpose.msra.mxu0 0
    %1836 = vmatpush.bf16.xpose.msra.mxu0 0
    %1837 = vmatpush.bf16.xpose.msra.mxu0 0
    %1838 = vmatpush.bf16.xpose.msra.mxu0 0
    %1839 = vmatpush.bf16.xpose.msra.mxu0 %v1830
    %1840 = vmatmul.bf16.gmra.mxu0 %v1827
    %v1841 = vpop.f32.mrf.mxu0
    %v1842 = vadd.f32 0.0, %v1841
    %v1843 = vpop.f32.mrf.mxu0
    %v1844 = vadd.f32 0.0, %v1843
    %1845 = vdwg.mxu0
    %1846 = vrot.lane.b32.xlu0 %v1282, 104
    %v1847 = vpop.permute.xlu0 %1846
    %1848 = vrot.lane.b32.xlu0 %v1282, 72
    %v1849 = vpop.permute.xlu0 %1848
    %v1851 = vsel %vm121, %v1847, 0
    %v1854 = vsel %vm121, %v1849, 0
    %1856 = vmatpush.bf16.xpose.msra.mxu0 0
    %1857 = vmatpush.bf16.xpose.msra.mxu0 0
    %1858 = vmatpush.bf16.xpose.msra.mxu0 0
    %1859 = vmatpush.bf16.xpose.msra.mxu0 0
    %1860 = vmatpush.bf16.xpose.msra.mxu0 0
    %1861 = vmatpush.bf16.xpose.msra.mxu0 0
    %1862 = vmatpush.bf16.xpose.msra.mxu0 0
    %1863 = vmatpush.bf16.xpose.msra.mxu0 %v1854
    %1864 = vmatmul.bf16.gmra.mxu0 %v1851
    %v1865 = vpop.f32.mrf.mxu0
    %v1866 = vadd.f32 0.0, %v1865
    %v1867 = vpop.f32.mrf.mxu0
    %v1868 = vadd.f32 0.0, %v1867
    %1869 = vdwg.mxu0
    %v1870 = vmul.f32 %v1842, 0.35355338
    %v1871 = vmul.f32 %v1844, 0.35355338
    %v1872 = vmul.f32 %v1866, 0.35355338
    %v1873 = vmul.f32 %v1868, 0.35355338
    %v1874 = vadd.f32 %v1870, %v174
    %v1875 = vadd.f32 %v1871, %v174
    %v1876 = vadd.f32 %v1872, %v174
    %v1877 = vadd.f32 %v1873, %v174
    %v1878 = vsel %vm180, %v1874, -inf
    %1879 = vmax.xlane.f32.xlu0 %v1878
    %v1880 = vpop.xlane.xlu0 %1879
    %v1881 = vsel %vm180, %v1875, -inf
    %1882 = vmax.xlane.f32.xlu0 %v1881
    %v1883 = vpop.xlane.xlu0 %1882
    %v1884 = vsel %vm180, %v1876, -inf
    %1885 = vmax.xlane.f32.xlu0 %v1884
    %v1886 = vpop.xlane.xlu0 %1885
    %v1887 = vsel %vm180, %v1877, -inf
    %1888 = vmax.xlane.f32.xlu0 %v1887
    %v1889 = vpop.xlane.xlu0 %1888
    %v1890 = vsub.f32 %v1874, %v1880
    %v1891 = vsub.f32 %v1875, %v1883
    %v1892 = vsub.f32 %v1876, %v1886
    %v1893 = vsub.f32 %v1877, %v1889
    %v1894 = vmul.f32 %v1890, 1.442695
    %v1895 = vpow.pop %v1894
    %v1896 = vmul.f32 %v1891, 1.442695
    %v1897 = vpow.pop %v1896
    %v1898 = vmul.f32 %v1892, 1.442695
    %v1899 = vpow.pop %v1898
    %v1900 = vmul.f32 %v1893, 1.442695
    %v1901 = vpow.pop %v1900
    %v1902 = vsel %vm180, %v1895, 0.0
    %1903 = vadd.xlane.f32.xlu0 %v1902
    %v1904 = vpop.xlane.xlu0 %1903
    %v1905 = vsel %vm180, %v1897, 0.0
    %1906 = vadd.xlane.f32.xlu0 %v1905
    %v1907 = vpop.xlane.xlu0 %1906
    %v1908 = vsel %vm180, %v1899, 0.0
    %1909 = vadd.xlane.f32.xlu0 %v1908
    %v1910 = vpop.xlane.xlu0 %1909
    %v1911 = vsel %vm180, %v1901, 0.0
    %1912 = vadd.xlane.f32.xlu0 %v1911
    %v1913 = vpop.xlane.xlu0 %1912
    %v1914 = vrcp.pop %v1904
    %v1915 = vrcp.pop %v1907
    %v1916 = vrcp.pop %v1910
    %v1917 = vrcp.pop %v1913
    %v1918 = vmul.f32 %v1895, %v1914
    %v1919 = vmul.f32 %v1897, %v1915
    %v1920 = vmul.f32 %v1899, %v1916
    %v1921 = vmul.f32 %v1901, %v1917
    %v1922 = vpack.c.bf16 %v1918, %v1918
    %v1923 = vpack.c.bf16 %v1919, %v1919
    %v1924 = vpack.c.bf16 %v1920, %v1920
    %v1925 = vpack.c.bf16 %v1921, %v1921
    %v1928 = vunpack.c.l.b16 %v1922
    %v1929 = vunpack.c.l.b16 %v1923
    %v1930 = vpack.c.b16 %v1929, %v1928
    %1931 = vrot.lane.b32.xlu0 %v1255, 40
    %v1932 = vpop.permute.xlu0 %1931
    %v1935 = vsel %vm180, %v1930, 0
    %1937 = vmatpush.bf16.msra.mxu0 0
    %1938 = vmatpush.bf16.msra.mxu0 0
    %1939 = vmatpush.bf16.msra.mxu0 0
    %1940 = vmatpush.bf16.msra.mxu0 0
    %1941 = vmatpush.bf16.msra.mxu0 0
    %1942 = vmatpush.bf16.msra.mxu0 0
    %1943 = vmatpush.bf16.msra.mxu0 0
    %1944 = vmatpush.bf16.msra.mxu0 %v1932
    %1945 = vmatmul.bf16.gmra.mxu0 %v1935
    %v1946 = vpop.f32.mrf.mxu0
    %v1947 = vadd.f32 0.0, %v1946
    %v1948 = vpop.f32.mrf.mxu0
    %v1949 = vadd.f32 0.0, %v1948
    %1950 = vdwg.mxu0
    %v1953 = vunpack.c.l.b16 %v1924
    %v1954 = vunpack.c.l.b16 %v1925
    %v1955 = vpack.c.b16 %v1954, %v1953
    %1956 = vrot.lane.b32.xlu0 %v1282, 40
    %v1957 = vpop.permute.xlu0 %1956
    %v1960 = vsel %vm180, %v1955, 0
    %1962 = vmatpush.bf16.msra.mxu0 0
    %1963 = vmatpush.bf16.msra.mxu0 0
    %1964 = vmatpush.bf16.msra.mxu0 0
    %1965 = vmatpush.bf16.msra.mxu0 0
    %1966 = vmatpush.bf16.msra.mxu0 0
    %1967 = vmatpush.bf16.msra.mxu0 0
    %1968 = vmatpush.bf16.msra.mxu0 0
    %1969 = vmatpush.bf16.msra.mxu0 %v1957
    %1970 = vmatmul.bf16.gmra.mxu0 %v1960
    %v1971 = vpop.f32.mrf.mxu0
    %v1972 = vadd.f32 0.0, %v1971
    %v1973 = vpop.f32.mrf.mxu0
    %v1974 = vadd.f32 0.0, %v1973
    %1975 = vdwg.mxu0
    %v1976 = vpack.c.bf16 %v1949, %v1947
    %v1977 = vpack.c.bf16 %v1974, %v1972
    %v1978 = vpack.c.b16 %v1217, %v1217
    %1979 = vrot.lane.b32.xlu0 %v1978, 32
    %v1980 = vpop.permute.xlu0 %1979
    %v1982 = vsel %vm121, %v1976, 0
    %v1985 = vsel %vm121, %v1977, 0
    %v1988 = vsel %vm446, %v1980, 0
    %1990 = vmatpush.bf16.msra.mxu0 0
    %1991 = vmatpush.bf16.msra.mxu0 0
    %1992 = vmatpush.bf16.msra.mxu0 0
    %1993 = vmatpush.bf16.msra.mxu0 0
    %1994 = vmatpush.bf16.msra.mxu0 0
    %1995 = vmatpush.bf16.msra.mxu0 0
    %1996 = vmatpush.bf16.msra.mxu0 0
    %1997 = vmatpush.bf16.msra.mxu0 %v1988
    %1998 = vmatmul.bf16.gmra.mxu0 %v1982
    %v1999 = vpop.f32.mrf.mxu0
    %v2000 = vadd.f32 0.0, %v1999
    %v2001 = vpop.f32.mrf.mxu0
    %v2002 = vadd.f32 0.0, %v2001
    %2003 = vmatmul.bf16.gmra.mxu0 %v1985
    %v2004 = vpop.f32.mrf.mxu0
    %v2005 = vadd.f32 0.0, %v2004
    %v2006 = vpop.f32.mrf.mxu0
    %v2007 = vadd.f32 0.0, %v2006
    %2008 = vdwg.mxu0
    %v2009 = vadd.f32 %v1818, %v2000
    %v2010 = vadd.f32 %v1819, %v2002
    %v2011 = vadd.f32 %v1820, %v2005
    %v2012 = vadd.f32 %v1821, %v2007
    %v2013 = vperm.slane %v1206, 1
    %v2014 = vadd.f32 %v2009, %v2013
    %v2015 = vadd.f32 %v2010, %v2013
    %v2016 = vadd.f32 %v2011, %v2013
    %v2017 = vadd.f32 %v2012, %v2013
    %v2018 = vadd.f32 %v1187, %v2014
    %v2019 = vadd.f32 %v1188, %v2015
    %v2020 = vadd.f32 %v1189, %v2016
    %v2021 = vadd.f32 %v1190, %v2017
    %v2022 = vsel %vm84, %v2018, 0.0
    %2023 = vadd.xlane.f32.xlu0 %v2022
    %v2024 = vpop.xlane.xlu0 %2023
    %v2025 = vsel %vm84, %v2019, 0.0
    %2026 = vadd.xlane.f32.xlu0 %v2025
    %v2027 = vpop.xlane.xlu0 %2026
    %v2028 = vsel %vm84, %v2020, 0.0
    %2029 = vadd.xlane.f32.xlu0 %v2028
    %v2030 = vpop.xlane.xlu0 %2029
    %v2031 = vsel %vm84, %v2021, 0.0
    %2032 = vadd.xlane.f32.xlu0 %v2031
    %v2033 = vpop.xlane.xlu0 %2032
    %v2034 = vmul.f32 %v2024, %v909
    %v2035 = vmul.f32 %v2027, %v909
    %v2036 = vmul.f32 %v2030, %v909
    %v2037 = vmul.f32 %v2033, %v909
    %v2038 = vsub.f32 %v2018, %v2034
    %v2039 = vsub.f32 %v2019, %v2035
    %v2040 = vsub.f32 %v2020, %v2036
    %v2041 = vsub.f32 %v2021, %v2037
    %v2042 = vmul.f32 %v2038, %v2038
    %v2043 = vmul.f32 %v2039, %v2039
    %v2044 = vmul.f32 %v2040, %v2040
    %v2045 = vmul.f32 %v2041, %v2041
    %v2046 = vsel %vm84, %v2042, 0.0
    %2047 = vadd.xlane.f32.xlu0 %v2046
    %v2048 = vpop.xlane.xlu0 %2047
    %v2049 = vsel %vm84, %v2043, 0.0
    %2050 = vadd.xlane.f32.xlu0 %v2049
    %v2051 = vpop.xlane.xlu0 %2050
    %v2052 = vsel %vm84, %v2044, 0.0
    %2053 = vadd.xlane.f32.xlu0 %v2052
    %v2054 = vpop.xlane.xlu0 %2053
    %v2055 = vsel %vm84, %v2045, 0.0
    %2056 = vadd.xlane.f32.xlu0 %v2055
    %v2057 = vpop.xlane.xlu0 %2056
    %v2058 = vmul.f32 %v2048, %v909
    %v2059 = vmul.f32 %v2051, %v909
    %v2060 = vmul.f32 %v2054, %v909
    %v2061 = vmul.f32 %v2057, %v909
    %v2062 = vadd.f32 %v2058, 1e-05
    %v2063 = vadd.f32 %v2059, 1e-05
    %v2064 = vadd.f32 %v2060, 1e-05
    %v2065 = vadd.f32 %v2061, 1e-05
    %v2066 = vrsqrt.pop %v2062
    %v2067 = vmul.f32 %v2066, %v2062
    %v2068 = vmul.f32 %v2067, %v2066
    %v2069 = vmul.f32 0.5, %v2068
    %v2070 = vsub.f32 1.5, %v2069
    %v2071 = vmul.f32 %v2066, %v2070
    %vm2072 = vweird.f32 %v2062
    %vm2073 = vweird.f32 %v2066
    %vm2074 = vmor %vm2072, %vm2073
    %v2075 = vsel %vm2074, %v2066, %v2071
    %v2076 = vrsqrt.pop %v2063
    %v2077 = vmul.f32 %v2076, %v2063
    %v2078 = vmul.f32 %v2077, %v2076
    %v2079 = vmul.f32 0.5, %v2078
    %v2080 = vsub.f32 1.5, %v2079
    %v2081 = vmul.f32 %v2076, %v2080
    %vm2082 = vweird.f32 %v2063
    %vm2083 = vweird.f32 %v2076
    %vm2084 = vmor %vm2082, %vm2083
    %v2085 = vsel %vm2084, %v2076, %v2081
    %v2086 = vrsqrt.pop %v2064
    %v2087 = vmul.f32 %v2086, %v2064
    %v2088 = vmul.f32 %v2087, %v2086
    %v2089 = vmul.f32 0.5, %v2088
    %v2090 = vsub.f32 1.5, %v2089
    %v2091 = vmul.f32 %v2086, %v2090
    %vm2092 = vweird.f32 %v2064
    %vm2093 = vweird.f32 %v2086
    %vm2094 = vmor %vm2092, %vm2093
    %v2095 = vsel %vm2094, %v2086, %v2091
    %v2096 = vrsqrt.pop %v2065
    %v2097 = vmul.f32 %v2096, %v2065
    %v2098 = vmul.f32 %v2097, %v2096
    %v2099 = vmul.f32 0.5, %v2098
    %v2100 = vsub.f32 1.5, %v2099
    %v2101 = vmul.f32 %v2096, %v2100
    %vm2102 = vweird.f32 %v2065
    %vm2103 = vweird.f32 %v2096
    %vm2104 = vmor %vm2102, %vm2103
    %v2105 = vsel %vm2104, %v2096, %v2101
    %v2106 = vmul.f32 %v2038, %v2075
    %v2107 = vmul.f32 %v2039, %v2085
    %v2108 = vmul.f32 %v2040, %v2095
    %v2109 = vmul.f32 %v2041, %v2105
    %v2110 = vperm.slane %v1206, 2
    %v2111 = vmul.f32 %v2106, %v2110
    %v2112 = vmul.f32 %v2107, %v2110
    %v2113 = vmul.f32 %v2108, %v2110
    %v2114 = vmul.f32 %v2109, %v2110
    %v2115 = vperm.slane %v1206, 3
    %v2116 = vadd.f32 %v2111, %v2115
    %v2117 = vadd.f32 %v2112, %v2115
    %v2118 = vadd.f32 %v2113, %v2115
    %v2119 = vadd.f32 %v2114, %v2115
    %v2120 = vpack.c.bf16 %v2117, %v2116
    %v2121 = vpack.c.bf16 %v2119, %v2118
    %v2122 = vperm.slane %v1206, 4
    %v2123 = vunpack.c.h.b16 %v1192
    %v2124 = vunpack.c.h.b16 %v1193
    %v2125 = vunpack.c.h.b16 %v1194
    %v2126 = vunpack.c.h.b16 %v1195
    %v2127 = vpack.c.b16 %v2124, %v2123
    %v2128 = vpack.c.b16 %v2126, %v2125
    %v2132 = vsel %vm84, %v2120, 0
    %v2135 = vsel %vm84, %v2121, 0
    %2137 = vmatpush.bf16.msra.mxu0 0
    %2138 = vmatpush.bf16.msra.mxu0 0
    %2139 = vmatpush.bf16.msra.mxu0 0
    %2140 = vmatpush.bf16.msra.mxu0 0
    %2141 = vmatpush.bf16.msra.mxu0 0
    %2142 = vmatpush.bf16.msra.mxu0 0
    %2143 = vmatpush.bf16.msra.mxu0 %v2128
    %2144 = vmatpush.bf16.msra.mxu0 %v2127
    %2145 = vmatmul.bf16.gmra.mxu0 %v2132
    %v2146 = vpop.f32.mrf.mxu0
    %v2147 = vadd.f32 %v2122, %v2146
    %v2148 = vpop.f32.mrf.mxu0
    %v2149 = vadd.f32 %v2122, %v2148
    %2150 = vmatmul.bf16.gmra.mxu0 %v2135
    %v2151 = vpop.f32.mrf.mxu0
    %v2152 = vadd.f32 %v2122, %v2151
    %v2153 = vpop.f32.mrf.mxu0
    %v2154 = vadd.f32 %v2122, %v2153
    %2155 = vdwg.mxu0
    %v2156 = vmax.f32 %v2147, 0.0
    %v2157 = vmax.f32 %v2149, 0.0
    %v2158 = vmax.f32 %v2152, 0.0
    %v2159 = vmax.f32 %v2154, 0.0
    %v2160 = vpack.c.bf16 %v2157, %v2156
    %v2161 = vpack.c.bf16 %v2159, %v2158
    %v2162 = vperm.slane %v1206, 5
    %v2171 = vunpack.c.l.b16 %v1197
    %v2172 = vunpack.c.l.b16 %v1198
    %v2173 = vunpack.c.l.b16 %v1199
    %v2174 = vunpack.c.l.b16 %v1200
    %v2175 = vunpack.c.l.b16 %v1201
    %v2176 = vunpack.c.l.b16 %v1202
    %v2177 = vunpack.c.l.b16 %v1203
    %v2178 = vunpack.c.l.b16 %v1204
    %v2179 = vpack.c.b16 %v2172, %v2171
    %v2180 = vpack.c.b16 %v2174, %v2173
    %v2181 = vpack.c.b16 %v2176, %v2175
    %v2182 = vpack.c.b16 %v2178, %v2177
    %v2188 = vsel %vm1063, %v2160, 0
    %v2191 = vsel %vm1063, %v2161, 0
    %2193 = vmatpush.bf16.msra.mxu0 0
    %2194 = vmatpush.bf16.msra.mxu0 0
    %2195 = vmatpush.bf16.msra.mxu0 0
    %2196 = vmatpush.bf16.msra.mxu0 0
    %2197 = vmatpush.bf16.msra.mxu0 %v2182
    %2198 = vmatpush.bf16.msra.mxu0 %v2181
    %2199 = vmatpush.bf16.msra.mxu0 %v2180
    %2200 = vmatpush.bf16.msra.mxu0 %v2179
    %2201 = vmatmul.bf16.gmra.mxu0 %v2188
    %v2202 = vpop.f32.mrf.mxu0
    %v2203 = vadd.f32 %v2162, %v2202
    %v2204 = vpop.f32.mrf.mxu0
    %v2205 = vadd.f32 %v2162, %v2204
    %2206 = vmatmul.bf16.gmra.mxu0 %v2191
    %v2207 = vpop.f32.mrf.mxu0
    %v2208 = vadd.f32 %v2162, %v2207
    %v2209 = vpop.f32.mrf.mxu0
    %v2210 = vadd.f32 %v2162, %v2209
    %2211 = vdwg.mxu0
    %v2212 = vadd.f32 %v2116, %v2203
    %v2213 = vadd.f32 %v2117, %v2205
    %v2214 = vadd.f32 %v2118, %v2208
    %v2215 = vadd.f32 %v2119, %v2210
    %v2216 = vsel %vm84, %v2212, 0.0
    %2217 = vadd.xlane.f32.xlu0 %v2216
    %v2218 = vpop.xlane.xlu0 %2217
    %v2219 = vsel %vm84, %v2213, 0.0
    %2220 = vadd.xlane.f32.xlu0 %v2219
    %v2221 = vpop.xlane.xlu0 %2220
    %v2222 = vsel %vm84, %v2214, 0.0
    %2223 = vadd.xlane.f32.xlu0 %v2222
    %v2224 = vpop.xlane.xlu0 %2223
    %v2225 = vsel %vm84, %v2215, 0.0
    %2226 = vadd.xlane.f32.xlu0 %v2225
    %v2227 = vpop.xlane.xlu0 %2226
    %v2228 = vmul.f32 %v2218, %v909
    %v2229 = vmul.f32 %v2221, %v909
    %v2230 = vmul.f32 %v2224, %v909
    %v2231 = vmul.f32 %v2227, %v909
    %v2232 = vsub.f32 %v2212, %v2228
    %v2233 = vsub.f32 %v2213, %v2229
    %v2234 = vsub.f32 %v2214, %v2230
    %v2235 = vsub.f32 %v2215, %v2231
    %v2236 = vmul.f32 %v2232, %v2232
    %v2237 = vmul.f32 %v2233, %v2233
    %v2238 = vmul.f32 %v2234, %v2234
    %v2239 = vmul.f32 %v2235, %v2235
    %v2240 = vsel %vm84, %v2236, 0.0
    %2241 = vadd.xlane.f32.xlu0 %v2240
    %v2242 = vpop.xlane.xlu0 %2241
    %v2243 = vsel %vm84, %v2237, 0.0
    %2244 = vadd.xlane.f32.xlu0 %v2243
    %v2245 = vpop.xlane.xlu0 %2244
    %v2246 = vsel %vm84, %v2238, 0.0
    %2247 = vadd.xlane.f32.xlu0 %v2246
    %v2248 = vpop.xlane.xlu0 %2247
    %v2249 = vsel %vm84, %v2239, 0.0
    %2250 = vadd.xlane.f32.xlu0 %v2249
    %v2251 = vpop.xlane.xlu0 %2250
    %v2252 = vmul.f32 %v2242, %v909
    %v2253 = vmul.f32 %v2245, %v909
    %v2254 = vmul.f32 %v2248, %v909
    %v2255 = vmul.f32 %v2251, %v909
    %v2256 = vadd.f32 %v2252, 1e-05
    %v2257 = vadd.f32 %v2253, 1e-05
    %v2258 = vadd.f32 %v2254, 1e-05
    %v2259 = vadd.f32 %v2255, 1e-05
    %v2260 = vrsqrt.pop %v2256
    %v2261 = vmul.f32 %v2260, %v2256
    %v2262 = vmul.f32 %v2261, %v2260
    %v2263 = vmul.f32 0.5, %v2262
    %v2264 = vsub.f32 1.5, %v2263
    %v2265 = vmul.f32 %v2260, %v2264
    %vm2266 = vweird.f32 %v2256
    %vm2267 = vweird.f32 %v2260
    %vm2268 = vmor %vm2266, %vm2267
    %v2269 = vsel %vm2268, %v2260, %v2265
    %v2270 = vrsqrt.pop %v2257
    %v2271 = vmul.f32 %v2270, %v2257
    %v2272 = vmul.f32 %v2271, %v2270
    %v2273 = vmul.f32 0.5, %v2272
    %v2274 = vsub.f32 1.5, %v2273
    %v2275 = vmul.f32 %v2270, %v2274
    %vm2276 = vweird.f32 %v2257
    %vm2277 = vweird.f32 %v2270
    %vm2278 = vmor %vm2276, %vm2277
    %v2279 = vsel %vm2278, %v2270, %v2275
    %v2280 = vrsqrt.pop %v2258
    %v2281 = vmul.f32 %v2280, %v2258
    %v2282 = vmul.f32 %v2281, %v2280
    %v2283 = vmul.f32 0.5, %v2282
    %v2284 = vsub.f32 1.5, %v2283
    %v2285 = vmul.f32 %v2280, %v2284
    %vm2286 = vweird.f32 %v2258
    %vm2287 = vweird.f32 %v2280
    %vm2288 = vmor %vm2286, %vm2287
    %v2289 = vsel %vm2288, %v2280, %v2285
    %v2290 = vrsqrt.pop %v2259
    %v2291 = vmul.f32 %v2290, %v2259
    %v2292 = vmul.f32 %v2291, %v2290
    %v2293 = vmul.f32 0.5, %v2292
    %v2294 = vsub.f32 1.5, %v2293
    %v2295 = vmul.f32 %v2290, %v2294
    %vm2296 = vweird.f32 %v2259
    %vm2297 = vweird.f32 %v2290
    %vm2298 = vmor %vm2296, %vm2297
    %v2299 = vsel %vm2298, %v2290, %v2295
    %v2300 = vmul.f32 %v2232, %v2269
    %v2301 = vmul.f32 %v2233, %v2279
    %v2302 = vmul.f32 %v2234, %v2289
    %v2303 = vmul.f32 %v2235, %v2299
    %v2304 = vperm.slane %v1206, 6
    %v2305 = vmul.f32 %v2300, %v2304
    %v2306 = vmul.f32 %v2301, %v2304
    %v2307 = vmul.f32 %v2302, %v2304
    %v2308 = vmul.f32 %v2303, %v2304
    %v2309 = vperm.slane %v1206, 7
    %v2310 = vadd.f32 %v2305, %v2309
    %v2311 = vadd.f32 %v2306, %v2309
    %v2312 = vadd.f32 %v2307, %v2309
    %v2313 = vadd.f32 %v2308, %v2309
    %2314 = vst.msk [vmem:[#allocation2] sm:$0xff] %vm84, %v2310
    %2315 = vst.msk [vmem:[#allocation2 + $0x8] sm:$0xff] %vm84, %v2311
    %2316 = vst.msk [vmem:[#allocation2 + $0x10] sm:$0xff] %vm84, %v2312
    %2317 = vst.msk [vmem:[#allocation2 + $0x18] sm:$0xff] %vm84, %v2313
    // Predicated region
    $region30: #{tpu_custom_call.1} parent=1 // pred_check
      %p2318 = pneg %p38
    $region31: #{tpu_custom_call.1} parent=1 // pred_check_branch
      %2320 = sbr.rel (%p2318) target = $region33
    $region32: #{tpu_custom_call.1} parent=1 // pred_region
      %2321 = vst.msk [vmem:[#allocation6] sm:$0xff] %vm84, %v2310
      %2322 = vst.msk [vmem:[#allocation6 + $0x8] sm:$0xff] %vm84, %v2311
      %2323 = vst.msk [vmem:[#allocation6 + $0x10] sm:$0xff] %vm84, %v2312
      %2324 = vst.msk [vmem:[#allocation6 + $0x18] sm:$0xff] %vm84, %v2313
    $region33: #{tpu_custom_call.1} parent=1 // pred_fallthru
      _
    // Predicated region
    $region34: #{tpu_custom_call.1} parent=1 // pred_check
      _
    $region35: #{tpu_custom_call.1} parent=1 // pred_check_branch
      %2326 = sbr.rel (0) target = $region37
    $region36: #{tpu_custom_call.1} parent=1 // pred_region
      %2328 = vsyncadd [#allocation5], 0
      %s2329 = sshll.u32 [#allocation6], 4
      %s2330 = int_to_ptr.vmem [resolvable:$true] %s2329
      %s2331 = sshll.u32 %s5, 4
      %s2332 = int_to_ptr.hbm [resolvable:$true] %s2331
      %2337 = dma.vmem_to_hbm [thread:$0]  %s2330, 512, %s2332, [#allocation5], 128, 128, 8
    $region37: #{tpu_custom_call.1} parent=1 // pred_fallthru
      _
    // Predicated region
    $region38: #{tpu_custom_call.1} parent=1 // pred_check
      _
    $region39: #{tpu_custom_call.1} parent=1 // pred_check_branch
      %2339 = sbr.rel (0) target = $region41
    $region40: #{tpu_custom_call.1} parent=1 // pred_region
      %2341 = dma.done [#allocation5], 512
    $region41: #{tpu_custom_call.1} parent=1 // pred_fallthru
      _
    %2342 = vsyncpa [#allocation4], 1
    %2343 = vsyncpa [#allocation5], 1

</llo_original>
